<compile_context>
chip_gen: v7x
topology: tpu7x:2x2x1
jax: 0.10.0
libtpu: 0.0.40
codegen_flags: <defaults>
</compile_context>

<pallas_src>
import functools

import jax
import jax.numpy as jnp
from jax.experimental import pallas as pl
from jax.experimental.pallas import tpu as pltpu


def _layernorm(v, g, b, eps):
    mu = jnp.mean(v, axis=-1, keepdims=True)
    vc = v - mu
    var = jnp.mean(vc * vc, axis=-1, keepdims=True)
    return vc * jax.lax.rsqrt(var + eps) * g + b


def _block_kernel(x_ref, g1_ref, be1_ref, wqkv_ref, wp_ref, bp_ref,
                  g2_ref, be2_ref, w1_ref, bm1_ref, w2_ref, bm2_ref,
                  o_ref, *, num_heads, eps):
    x = x_ref[0].astype(jnp.float32)                 # (N, C) for this batch elem
    n, c = x.shape
    hd = c // num_heads
    scale = hd ** (-0.5)

    # ---- LayerNorm 1 ------------------------------------------------------
    h = _layernorm(x, g1_ref[...], be1_ref[...], eps)

    # ---- QKV projection (qkv_bias=False, matching module default) ---------
    qkv = jnp.dot(h, wqkv_ref[...], preferred_element_type=jnp.float32)  # (N, 3C)
    q = qkv[:, 0 * c:1 * c]
    k = qkv[:, 1 * c:2 * c]
    v = qkv[:, 2 * c:3 * c]

    # ---- multi-head attention (static Python loop over heads) -------------
    heads = []
    for hh in range(num_heads):
        sl = slice(hh * hd, (hh + 1) * hd)
        qh, kh, vh = q[:, sl], k[:, sl], v[:, sl]
        # q @ k^T without an explicit transpose (contract last dims of both)
        s = jax.lax.dot_general(qh, kh, (((1,), (1,)), ((), ())),
                                preferred_element_type=jnp.float32) * scale
        s = s - jnp.max(s, axis=-1, keepdims=True)
        p = jnp.exp(s)
        p = p / jnp.sum(p, axis=-1, keepdims=True)
        heads.append(jnp.dot(p, vh, preferred_element_type=jnp.float32))
    attn = jnp.concatenate(heads, axis=-1)                               # (N, C)

    # ---- output projection + residual --------------------------------------
    attn = jnp.dot(attn, wp_ref[...], preferred_element_type=jnp.float32) + bp_ref[...]
    x1 = x + attn

    # ---- LayerNorm 2 + MLP + residual ---------------------------------------
    h2 = _layernorm(x1, g2_ref[...], be2_ref[...], eps)
    m = jnp.dot(h2, w1_ref[...], preferred_element_type=jnp.float32) + bm1_ref[...]
    # TODO(synk): torch nn.GELU default is the exact erf-GELU; tanh approximation
    # is used here for guaranteed Mosaic lowering (max deviation ~1e-3).
    m = jax.nn.gelu(m, approximate=True)
    m = jnp.dot(m, w2_ref[...], preferred_element_type=jnp.float32) + bm2_ref[...]

    o_ref[0] = (x1 + m).astype(o_ref.dtype)


def transformer_block(x, g1, be1, wqkv, wp, bp, g2, be2, w1, bm1, w2, bm2, *,
                      num_heads, eps=1e-6):
    """Fused Block.forward for x of shape (B, N, C)."""
    B, N, C = x.shape
    H3 = wqkv.shape[1]          # 3*C
    Hm = w1.shape[1]            # mlp hidden dim

    def full(shape):
        # whole-array block, same block for every grid step
        return pl.BlockSpec(shape, lambda b: (0,) * len(shape))

    kern = functools.partial(_block_kernel, num_heads=num_heads, eps=eps)

    return pl.pallas_call(
        kern,
        out_shape=jax.ShapeDtypeStruct((B, N, C), x.dtype),
        grid_spec=pltpu.PrefetchScalarGridSpec(
            num_scalar_prefetch=0,
            grid=(B,),
            in_specs=[
                pl.BlockSpec((1, N, C), lambda b: (b, 0, 0)),   # x (one batch elem)
                full((1, C)), full((1, C)),                     # LN1 gamma, beta
                full((C, H3)),                                  # W_qkv
                full((C, C)), full((1, C)),                     # W_proj, b_proj
                full((1, C)), full((1, C)),                     # LN2 gamma, beta
                full((C, Hm)), full((1, Hm)),                   # W_fc1, b_fc1
                full((Hm, C)), full((1, C)),                    # W_fc2, b_fc2
            ],
            out_specs=pl.BlockSpec((1, N, C), lambda b: (b, 0, 0)),
        ),
        compiler_params=pltpu.CompilerParams(
            dimension_semantics=("parallel",)),   # v7x: both TCs take batch steps
    )(x, g1, be1, wqkv, wp, bp, g2, be2, w1, bm1, w2, bm2)


def block_reference(x, g1, be1, wqkv, wp, bp, g2, be2, w1, bm1, w2, bm2, *,
                    num_heads, eps=1e-6):
    """Pure-JAX reference mirroring the PyTorch Block.forward exactly."""
    B, N, C = x.shape
    hd = C // num_heads
    h = _layernorm(x, g1, be1, eps)
    qkv = h @ wqkv                                         # (B, N, 3C)
    qkv = qkv.reshape(B, N, 3, num_heads, hd).transpose(2, 0, 3, 1, 4)
    q, k, v = qkv[0], qkv[1], qkv[2]                       # (B, H, N, hd)
    attn = (q @ jnp.swapaxes(k, -2, -1)) * (hd ** (-0.5))
    attn = jax.nn.softmax(attn, axis=-1)
    y = (attn @ v).transpose(0, 2, 1, 3).reshape(B, N, C)
    y = y @ wp + bp
    x1 = x + y
    h2 = _layernorm(x1, g2, be2, eps)
    m = jax.nn.gelu(h2 @ w1 + bm1, approximate=True)
    m = m @ w2 + bm2
    return x1 + m


if __name__ == "__main__":
    B, N, C = 2, 8, 32
    num_heads = 4
    hidden = 4 * C          # mlp_ratio = 4.0

    key = jax.random.PRNGKey(0)
    keys = jax.random.split(key, 12)
    x = jax.random.normal(keys[0], (B, N, C), dtype=jnp.float32)

    g1 = jnp.ones((1, C), jnp.float32) + 0.05 * jax.random.normal(keys[1], (1, C))
    be1 = 0.05 * jax.random.normal(keys[2], (1, C), dtype=jnp.float32)
    wqkv = 0.1 * jax.random.normal(keys[3], (C, 3 * C), dtype=jnp.float32)
    wp = 0.1 * jax.random.normal(keys[4], (C, C), dtype=jnp.float32)
    bp = 0.05 * jax.random.normal(keys[5], (1, C), dtype=jnp.float32)
    g2 = jnp.ones((1, C), jnp.float32) + 0.05 * jax.random.normal(keys[6], (1, C))
    be2 = 0.05 * jax.random.normal(keys[7], (1, C), dtype=jnp.float32)
    w1 = 0.1 * jax.random.normal(keys[8], (C, hidden), dtype=jnp.float32)
    bm1 = 0.05 * jax.random.normal(keys[9], (1, hidden), dtype=jnp.float32)
    w2 = 0.1 * jax.random.normal(keys[10], (hidden, C), dtype=jnp.float32)
    bm2 = 0.05 * jax.random.normal(keys[11], (1, C), dtype=jnp.float32)

    out = transformer_block(x, g1, be1, wqkv, wp, bp, g2, be2, w1, bm1, w2, bm2,
                            num_heads=num_heads)
    jax.block_until_ready(out)

    ref = block_reference(x, g1, be1, wqkv, wp, bp, g2, be2, w1, bm1, w2, bm2,
                          num_heads=num_heads)
    assert out.shape == x.shape and out.dtype == x.dtype
    err = float(jnp.max(jnp.abs(out - ref)))
    assert jnp.allclose(out, ref, atol=1e-4, rtol=1e-4), err

    print("KERNEL_OK")
</pallas_src>

<mosaic_0001>
module attributes {stable_mosaic.version = 11 : i64} {
  func.func @_block_kernel(%arg0: i32, %arg1: memref<1x8x32xf32, #tpu.memory_space<vmem>>, %arg2: memref<1x32xf32, #tpu.memory_space<vmem>>, %arg3: memref<1x32xf32, #tpu.memory_space<vmem>>, %arg4: memref<32x96xf32, #tpu.memory_space<vmem>>, %arg5: memref<32x32xf32, #tpu.memory_space<vmem>>, %arg6: memref<1x32xf32, #tpu.memory_space<vmem>>, %arg7: memref<1x32xf32, #tpu.memory_space<vmem>>, %arg8: memref<1x32xf32, #tpu.memory_space<vmem>>, %arg9: memref<32x128xf32, #tpu.memory_space<vmem>>, %arg10: memref<1x128xf32, #tpu.memory_space<vmem>>, %arg11: memref<128x32xf32, #tpu.memory_space<vmem>>, %arg12: memref<1x32xf32, #tpu.memory_space<vmem>>, %arg13: memref<1x8x32xf32, #tpu.memory_space<vmem>>) attributes {dimension_semantics = [#tpu.dimension_semantics<parallel>], iteration_bounds = array<i64: 2>, scalar_prefetch = 0 : i64, scratch_operands = 0 : i64, tpu.core_type = #tpu.core_type<tc>, window_params = [{transform_indices = @transform_0, window_bounds = array<i64: 1, 8, 32>}, {pipeline_mode = #tpu.pipeline_mode<synchronous>, transform_indices = @transform_1, window_bounds = array<i64: 1, 32>}, {pipeline_mode = #tpu.pipeline_mode<synchronous>, transform_indices = @transform_2, window_bounds = array<i64: 1, 32>}, {pipeline_mode = #tpu.pipeline_mode<synchronous>, transform_indices = @transform_3, window_bounds = array<i64: 32, 96>}, {pipeline_mode = #tpu.pipeline_mode<synchronous>, transform_indices = @transform_4, window_bounds = array<i64: 32, 32>}, {pipeline_mode = #tpu.pipeline_mode<synchronous>, transform_indices = @transform_5, window_bounds = array<i64: 1, 32>}, {pipeline_mode = #tpu.pipeline_mode<synchronous>, transform_indices = @transform_6, window_bounds = array<i64: 1, 32>}, {pipeline_mode = #tpu.pipeline_mode<synchronous>, transform_indices = @transform_7, window_bounds = array<i64: 1, 32>}, {pipeline_mode = #tpu.pipeline_mode<synchronous>, transform_indices = @transform_8, window_bounds = array<i64: 32, 128>}, {pipeline_mode = #tpu.pipeline_mode<synchronous>, transform_indices = @transform_9, window_bounds = array<i64: 1, 128>}, {pipeline_mode = #tpu.pipeline_mode<synchronous>, transform_indices = @transform_10, window_bounds = array<i64: 128, 32>}, {pipeline_mode = #tpu.pipeline_mode<synchronous>, transform_indices = @transform_11, window_bounds = array<i64: 1, 32>}, {transform_indices = @transform_12, window_bounds = array<i64: 1, 8, 32>}]} {
    %c0 = arith.constant 0 : index
    %c0_0 = arith.constant 0 : index
    %c0_1 = arith.constant 0 : index
    %0 = vector.load %arg1[%c0, %c0_0, %c0_1] : memref<1x8x32xf32, #tpu.memory_space<vmem>>, vector<1x8x32xf32>
    %1 = vector.shape_cast %0 : vector<1x8x32xf32> to vector<8x32xf32>
    %c0_2 = arith.constant 0 : index
    %c0_3 = arith.constant 0 : index
    %2 = vector.load %arg2[%c0_2, %c0_3] : memref<1x32xf32, #tpu.memory_space<vmem>>, vector<1x32xf32>
    %c0_4 = arith.constant 0 : index
    %c0_5 = arith.constant 0 : index
    %3 = vector.load %arg3[%c0_4, %c0_5] : memref<1x32xf32, #tpu.memory_space<vmem>>, vector<1x32xf32>
    %cst = arith.constant dense<0.000000e+00> : vector<8xf32>
    %4 = vector.multi_reduction <add>, %1, %cst [1] : vector<8x32xf32> to vector<8xf32>
    %5 = vector.shape_cast %4 : vector<8xf32> to vector<8x1xf32>
    %cst_6 = arith.constant 3.200000e+01 : f32
    %6 = vector.broadcast %cst_6 : f32 to vector<8x1xf32>
    %7 = arith.divf %5, %6 : vector<8x1xf32>
    %8 = vector.broadcast %7 : vector<8x1xf32> to vector<8x32xf32>
    %9 = arith.subf %1, %8 : vector<8x32xf32>
    %10 = arith.mulf %9, %9 : vector<8x32xf32>
    %cst_7 = arith.constant dense<0.000000e+00> : vector<8xf32>
    %11 = vector.multi_reduction <add>, %10, %cst_7 [1] : vector<8x32xf32> to vector<8xf32>
    %12 = vector.shape_cast %11 : vector<8xf32> to vector<8x1xf32>
    %cst_8 = arith.constant 3.200000e+01 : f32
    %13 = vector.broadcast %cst_8 : f32 to vector<8x1xf32>
    %14 = arith.divf %12, %13 : vector<8x1xf32>
    %cst_9 = arith.constant 9.99999997E-7 : f32
    %15 = vector.broadcast %cst_9 : f32 to vector<8x1xf32>
    %16 = arith.addf %14, %15 : vector<8x1xf32>
    %17 = math.rsqrt %16 : vector<8x1xf32>
    %18 = vector.broadcast %17 : vector<8x1xf32> to vector<8x32xf32>
    %19 = arith.mulf %9, %18 : vector<8x32xf32>
    %20 = vector.broadcast %2 : vector<1x32xf32> to vector<8x32xf32>
    %21 = arith.mulf %19, %20 : vector<8x32xf32>
    %22 = vector.broadcast %3 : vector<1x32xf32> to vector<8x32xf32>
    %23 = arith.addf %21, %22 : vector<8x32xf32>
    %c0_10 = arith.constant 0 : index
    %c0_11 = arith.constant 0 : index
    %24 = vector.load %arg4[%c0_10, %c0_11] : memref<32x96xf32, #tpu.memory_space<vmem>>, vector<32x96xf32>
    %cst_12 = arith.constant dense<0.000000e+00> : vector<8x96xf32>
    %25 = tpu.matmul %23, %24, %cst_12 {dimension_numbers = #tpu.dot_dimension_numbers<[1], [0], [0], [1], [0, 0, 1, 1], [], []>} : vector<8x32xf32>, vector<32x96xf32>, vector<8x96xf32> -> vector<8x96xf32>
    %26 = vector.extract_strided_slice %25 {offsets = [0, 0], sizes = [8, 32], strides = [1, 1]} : vector<8x96xf32> to vector<8x32xf32>
    %27 = vector.extract_strided_slice %25 {offsets = [0, 32], sizes = [8, 32], strides = [1, 1]} : vector<8x96xf32> to vector<8x32xf32>
    %28 = vector.extract_strided_slice %25 {offsets = [0, 64], sizes = [8, 32], strides = [1, 1]} : vector<8x96xf32> to vector<8x32xf32>
    %29 = vector.extract_strided_slice %26 {offsets = [0, 0], sizes = [8, 8], strides = [1, 1]} : vector<8x32xf32> to vector<8x8xf32>
    %30 = vector.extract_strided_slice %27 {offsets = [0, 0], sizes = [8, 8], strides = [1, 1]} : vector<8x32xf32> to vector<8x8xf32>
    %31 = vector.extract_strided_slice %28 {offsets = [0, 0], sizes = [8, 8], strides = [1, 1]} : vector<8x32xf32> to vector<8x8xf32>
    %cst_13 = arith.constant dense<0.000000e+00> : vector<8x8xf32>
    %32 = tpu.matmul %29, %30, %cst_13 {dimension_numbers = #tpu.dot_dimension_numbers<[1], [1], [0], [0], [0, 0, 1, 0], [], []>} : vector<8x8xf32>, vector<8x8xf32>, vector<8x8xf32> -> vector<8x8xf32>
    %cst_14 = arith.constant 0.353553385 : f32
    %33 = vector.broadcast %cst_14 : f32 to vector<8x8xf32>
    %34 = arith.mulf %32, %33 : vector<8x8xf32>
    %cst_15 = arith.constant dense<0xFF800000> : vector<8xf32>
    %35 = vector.multi_reduction <maximumf>, %34, %cst_15 [1] : vector<8x8xf32> to vector<8xf32>
    %36 = vector.shape_cast %35 : vector<8xf32> to vector<8x1xf32>
    %37 = vector.broadcast %36 : vector<8x1xf32> to vector<8x8xf32>
    %38 = arith.subf %34, %37 : vector<8x8xf32>
    %39 = math.exp %38 : vector<8x8xf32>
    %cst_16 = arith.constant dense<0.000000e+00> : vector<8xf32>
    %40 = vector.multi_reduction <add>, %39, %cst_16 [1] : vector<8x8xf32> to vector<8xf32>
    %41 = vector.shape_cast %40 : vector<8xf32> to vector<8x1xf32>
    %42 = vector.broadcast %41 : vector<8x1xf32> to vector<8x8xf32>
    %43 = arith.divf %39, %42 : vector<8x8xf32>
    %cst_17 = arith.constant dense<0.000000e+00> : vector<8x8xf32>
    %44 = tpu.matmul %43, %31, %cst_17 {dimension_numbers = #tpu.dot_dimension_numbers<[1], [0], [0], [1], [0, 0, 1, 1], [], []>} : vector<8x8xf32>, vector<8x8xf32>, vector<8x8xf32> -> vector<8x8xf32>
    %45 = vector.extract_strided_slice %26 {offsets = [0, 8], sizes = [8, 8], strides = [1, 1]} : vector<8x32xf32> to vector<8x8xf32>
    %46 = vector.extract_strided_slice %27 {offsets = [0, 8], sizes = [8, 8], strides = [1, 1]} : vector<8x32xf32> to vector<8x8xf32>
    %47 = vector.extract_strided_slice %28 {offsets = [0, 8], sizes = [8, 8], strides = [1, 1]} : vector<8x32xf32> to vector<8x8xf32>
    %cst_18 = arith.constant dense<0.000000e+00> : vector<8x8xf32>
    %48 = tpu.matmul %45, %46, %cst_18 {dimension_numbers = #tpu.dot_dimension_numbers<[1], [1], [0], [0], [0, 0, 1, 0], [], []>} : vector<8x8xf32>, vector<8x8xf32>, vector<8x8xf32> -> vector<8x8xf32>
    %cst_19 = arith.constant 0.353553385 : f32
    %49 = vector.broadcast %cst_19 : f32 to vector<8x8xf32>
    %50 = arith.mulf %48, %49 : vector<8x8xf32>
    %cst_20 = arith.constant dense<0xFF800000> : vector<8xf32>
    %51 = vector.multi_reduction <maximumf>, %50, %cst_20 [1] : vector<8x8xf32> to vector<8xf32>
    %52 = vector.shape_cast %51 : vector<8xf32> to vector<8x1xf32>
    %53 = vector.broadcast %52 : vector<8x1xf32> to vector<8x8xf32>
    %54 = arith.subf %50, %53 : vector<8x8xf32>
    %55 = math.exp %54 : vector<8x8xf32>
    %cst_21 = arith.constant dense<0.000000e+00> : vector<8xf32>
    %56 = vector.multi_reduction <add>, %55, %cst_21 [1] : vector<8x8xf32> to vector<8xf32>
    %57 = vector.shape_cast %56 : vector<8xf32> to vector<8x1xf32>
    %58 = vector.broadcast %57 : vector<8x1xf32> to vector<8x8xf32>
    %59 = arith.divf %55, %58 : vector<8x8xf32>
    %cst_22 = arith.constant dense<0.000000e+00> : vector<8x8xf32>
    %60 = tpu.matmul %59, %47, %cst_22 {dimension_numbers = #tpu.dot_dimension_numbers<[1], [0], [0], [1], [0, 0, 1, 1], [], []>} : vector<8x8xf32>, vector<8x8xf32>, vector<8x8xf32> -> vector<8x8xf32>
    %61 = vector.extract_strided_slice %26 {offsets = [0, 16], sizes = [8, 8], strides = [1, 1]} : vector<8x32xf32> to vector<8x8xf32>
    %62 = vector.extract_strided_slice %27 {offsets = [0, 16], sizes = [8, 8], strides = [1, 1]} : vector<8x32xf32> to vector<8x8xf32>
    %63 = vector.extract_strided_slice %28 {offsets = [0, 16], sizes = [8, 8], strides = [1, 1]} : vector<8x32xf32> to vector<8x8xf32>
    %cst_23 = arith.constant dense<0.000000e+00> : vector<8x8xf32>
    %64 = tpu.matmul %61, %62, %cst_23 {dimension_numbers = #tpu.dot_dimension_numbers<[1], [1], [0], [0], [0, 0, 1, 0], [], []>} : vector<8x8xf32>, vector<8x8xf32>, vector<8x8xf32> -> vector<8x8xf32>
    %cst_24 = arith.constant 0.353553385 : f32
    %65 = vector.broadcast %cst_24 : f32 to vector<8x8xf32>
    %66 = arith.mulf %64, %65 : vector<8x8xf32>
    %cst_25 = arith.constant dense<0xFF800000> : vector<8xf32>
    %67 = vector.multi_reduction <maximumf>, %66, %cst_25 [1] : vector<8x8xf32> to vector<8xf32>
    %68 = vector.shape_cast %67 : vector<8xf32> to vector<8x1xf32>
    %69 = vector.broadcast %68 : vector<8x1xf32> to vector<8x8xf32>
    %70 = arith.subf %66, %69 : vector<8x8xf32>
    %71 = math.exp %70 : vector<8x8xf32>
    %cst_26 = arith.constant dense<0.000000e+00> : vector<8xf32>
    %72 = vector.multi_reduction <add>, %71, %cst_26 [1] : vector<8x8xf32> to vector<8xf32>
    %73 = vector.shape_cast %72 : vector<8xf32> to vector<8x1xf32>
    %74 = vector.broadcast %73 : vector<8x1xf32> to vector<8x8xf32>
    %75 = arith.divf %71, %74 : vector<8x8xf32>
    %cst_27 = arith.constant dense<0.000000e+00> : vector<8x8xf32>
    %76 = tpu.matmul %75, %63, %cst_27 {dimension_numbers = #tpu.dot_dimension_numbers<[1], [0], [0], [1], [0, 0, 1, 1], [], []>} : vector<8x8xf32>, vector<8x8xf32>, vector<8x8xf32> -> vector<8x8xf32>
    %77 = vector.extract_strided_slice %26 {offsets = [0, 24], sizes = [8, 8], strides = [1, 1]} : vector<8x32xf32> to vector<8x8xf32>
    %78 = vector.extract_strided_slice %27 {offsets = [0, 24], sizes = [8, 8], strides = [1, 1]} : vector<8x32xf32> to vector<8x8xf32>
    %79 = vector.extract_strided_slice %28 {offsets = [0, 24], sizes = [8, 8], strides = [1, 1]} : vector<8x32xf32> to vector<8x8xf32>
    %cst_28 = arith.constant dense<0.000000e+00> : vector<8x8xf32>
    %80 = tpu.matmul %77, %78, %cst_28 {dimension_numbers = #tpu.dot_dimension_numbers<[1], [1], [0], [0], [0, 0, 1, 0], [], []>} : vector<8x8xf32>, vector<8x8xf32>, vector<8x8xf32> -> vector<8x8xf32>
    %cst_29 = arith.constant 0.353553385 : f32
    %81 = vector.broadcast %cst_29 : f32 to vector<8x8xf32>
    %82 = arith.mulf %80, %81 : vector<8x8xf32>
    %cst_30 = arith.constant dense<0xFF800000> : vector<8xf32>
    %83 = vector.multi_reduction <maximumf>, %82, %cst_30 [1] : vector<8x8xf32> to vector<8xf32>
    %84 = vector.shape_cast %83 : vector<8xf32> to vector<8x1xf32>
    %85 = vector.broadcast %84 : vector<8x1xf32> to vector<8x8xf32>
    %86 = arith.subf %82, %85 : vector<8x8xf32>
    %87 = math.exp %86 : vector<8x8xf32>
    %cst_31 = arith.constant dense<0.000000e+00> : vector<8xf32>
    %88 = vector.multi_reduction <add>, %87, %cst_31 [1] : vector<8x8xf32> to vector<8xf32>
    %89 = vector.shape_cast %88 : vector<8xf32> to vector<8x1xf32>
    %90 = vector.broadcast %89 : vector<8x1xf32> to vector<8x8xf32>
    %91 = arith.divf %87, %90 : vector<8x8xf32>
    %cst_32 = arith.constant dense<0.000000e+00> : vector<8x8xf32>
    %92 = tpu.matmul %91, %79, %cst_32 {dimension_numbers = #tpu.dot_dimension_numbers<[1], [0], [0], [1], [0, 0, 1, 1], [], []>} : vector<8x8xf32>, vector<8x8xf32>, vector<8x8xf32> -> vector<8x8xf32>
    %93 = tpu.concatenate %44, %60, %76, %92 in 1 : vector<8x8xf32>, vector<8x8xf32>, vector<8x8xf32>, vector<8x8xf32> -> vector<8x32xf32>
    %c0_33 = arith.constant 0 : index
    %c0_34 = arith.constant 0 : index
    %94 = vector.load %arg5[%c0_33, %c0_34] : memref<32x32xf32, #tpu.memory_space<vmem>>, vector<32x32xf32>
    %cst_35 = arith.constant dense<0.000000e+00> : vector<8x32xf32>
    %95 = tpu.matmul %93, %94, %cst_35 {dimension_numbers = #tpu.dot_dimension_numbers<[1], [0], [0], [1], [0, 0, 1, 1], [], []>} : vector<8x32xf32>, vector<32x32xf32>, vector<8x32xf32> -> vector<8x32xf32>
    %c0_36 = arith.constant 0 : index
    %c0_37 = arith.constant 0 : index
    %96 = vector.load %arg6[%c0_36, %c0_37] : memref<1x32xf32, #tpu.memory_space<vmem>>, vector<1x32xf32>
    %97 = vector.broadcast %96 : vector<1x32xf32> to vector<8x32xf32>
    %98 = arith.addf %95, %97 : vector<8x32xf32>
    %99 = arith.addf %1, %98 : vector<8x32xf32>
    %c0_38 = arith.constant 0 : index
    %c0_39 = arith.constant 0 : index
    %100 = vector.load %arg7[%c0_38, %c0_39] : memref<1x32xf32, #tpu.memory_space<vmem>>, vector<1x32xf32>
    %c0_40 = arith.constant 0 : index
    %c0_41 = arith.constant 0 : index
    %101 = vector.load %arg8[%c0_40, %c0_41] : memref<1x32xf32, #tpu.memory_space<vmem>>, vector<1x32xf32>
    %cst_42 = arith.constant dense<0.000000e+00> : vector<8xf32>
    %102 = vector.multi_reduction <add>, %99, %cst_42 [1] : vector<8x32xf32> to vector<8xf32>
    %103 = vector.shape_cast %102 : vector<8xf32> to vector<8x1xf32>
    %cst_43 = arith.constant 3.200000e+01 : f32
    %104 = vector.broadcast %cst_43 : f32 to vector<8x1xf32>
    %105 = arith.divf %103, %104 : vector<8x1xf32>
    %106 = vector.broadcast %105 : vector<8x1xf32> to vector<8x32xf32>
    %107 = arith.subf %99, %106 : vector<8x32xf32>
    %108 = arith.mulf %107, %107 : vector<8x32xf32>
    %cst_44 = arith.constant dense<0.000000e+00> : vector<8xf32>
    %109 = vector.multi_reduction <add>, %108, %cst_44 [1] : vector<8x32xf32> to vector<8xf32>
    %110 = vector.shape_cast %109 : vector<8xf32> to vector<8x1xf32>
    %cst_45 = arith.constant 3.200000e+01 : f32
    %111 = vector.broadcast %cst_45 : f32 to vector<8x1xf32>
    %112 = arith.divf %110, %111 : vector<8x1xf32>
    %cst_46 = arith.constant 9.99999997E-7 : f32
    %113 = vector.broadcast %cst_46 : f32 to vector<8x1xf32>
    %114 = arith.addf %112, %113 : vector<8x1xf32>
    %115 = math.rsqrt %114 : vector<8x1xf32>
    %116 = vector.broadcast %115 : vector<8x1xf32> to vector<8x32xf32>
    %117 = arith.mulf %107, %116 : vector<8x32xf32>
    %118 = vector.broadcast %100 : vector<1x32xf32> to vector<8x32xf32>
    %119 = arith.mulf %117, %118 : vector<8x32xf32>
    %120 = vector.broadcast %101 : vector<1x32xf32> to vector<8x32xf32>
    %121 = arith.addf %119, %120 : vector<8x32xf32>
    %c0_47 = arith.constant 0 : index
    %c0_48 = arith.constant 0 : index
    %122 = vector.load %arg9[%c0_47, %c0_48] : memref<32x128xf32, #tpu.memory_space<vmem>>, vector<32x128xf32>
    %cst_49 = arith.constant dense<0.000000e+00> : vector<8x128xf32>
    %123 = tpu.matmul %121, %122, %cst_49 {dimension_numbers = #tpu.dot_dimension_numbers<[1], [0], [0], [1], [0, 0, 1, 1], [], []>} : vector<8x32xf32>, vector<32x128xf32>, vector<8x128xf32> -> vector<8x128xf32>
    %c0_50 = arith.constant 0 : index
    %c0_51 = arith.constant 0 : index
    %124 = vector.load %arg10[%c0_50, %c0_51] : memref<1x128xf32, #tpu.memory_space<vmem>>, vector<1x128xf32>
    %125 = vector.broadcast %124 : vector<1x128xf32> to vector<8x128xf32>
    %126 = arith.addf %123, %125 : vector<8x128xf32>
    %127 = arith.mulf %126, %126 : vector<8x128xf32>
    %128 = arith.mulf %126, %127 : vector<8x128xf32>
    %cst_52 = arith.constant 4.471500e-02 : f32
    %129 = vector.broadcast %cst_52 : f32 to vector<8x128xf32>
    %130 = arith.mulf %129, %128 : vector<8x128xf32>
    %131 = arith.addf %126, %130 : vector<8x128xf32>
    %cst_53 = arith.constant 0.797884583 : f32
    %132 = vector.broadcast %cst_53 : f32 to vector<8x128xf32>
    %133 = arith.mulf %132, %131 : vector<8x128xf32>
    %134 = math.tanh %133 : vector<8x128xf32>
    %cst_54 = arith.constant 1.000000e+00 : f32
    %135 = vector.broadcast %cst_54 : f32 to vector<8x128xf32>
    %136 = arith.addf %135, %134 : vector<8x128xf32>
    %cst_55 = arith.constant 5.000000e-01 : f32
    %137 = vector.broadcast %cst_55 : f32 to vector<8x128xf32>
    %138 = arith.mulf %137, %136 : vector<8x128xf32>
    %139 = arith.mulf %126, %138 : vector<8x128xf32>
    %c0_56 = arith.constant 0 : index
    %c0_57 = arith.constant 0 : index
    %140 = vector.load %arg11[%c0_56, %c0_57] : memref<128x32xf32, #tpu.memory_space<vmem>>, vector<128x32xf32>
    %cst_58 = arith.constant dense<0.000000e+00> : vector<8x32xf32>
    %141 = tpu.matmul %139, %140, %cst_58 {dimension_numbers = #tpu.dot_dimension_numbers<[1], [0], [0], [1], [0, 0, 1, 1], [], []>} : vector<8x128xf32>, vector<128x32xf32>, vector<8x32xf32> -> vector<8x32xf32>
    %c0_59 = arith.constant 0 : index
    %c0_60 = arith.constant 0 : index
    %142 = vector.load %arg12[%c0_59, %c0_60] : memref<1x32xf32, #tpu.memory_space<vmem>>, vector<1x32xf32>
    %143 = vector.broadcast %142 : vector<1x32xf32> to vector<8x32xf32>
    %144 = arith.addf %141, %143 : vector<8x32xf32>
    %145 = arith.addf %99, %144 : vector<8x32xf32>
    %c0_61 = arith.constant 0 : index
    %c0_62 = arith.constant 0 : index
    %c0_63 = arith.constant 0 : index
    %146 = vector.load %arg13[%c0_61, %c0_62, %c0_63] : memref<1x8x32xf32, #tpu.memory_space<vmem>>, vector<1x8x32xf32>
    %147 = vector.shape_cast %146 : vector<1x8x32xf32> to vector<8x32xf32>
    %148 = vector.shape_cast %145 : vector<8x32xf32> to vector<1x8x32xf32>
    tpu.vector_store %arg13[%c0_61, %c0_62, %c0_63], %148 {strides = array<i32>} : memref<1x8x32xf32, #tpu.memory_space<vmem>>, vector<1x8x32xf32>,
    return
  }
  func.func @transform_0(%arg0: i32) -> (i32, i32, i32) {
    %c0_i32 = arith.constant 0 : i32
    %c0_i32_0 = arith.constant 0 : i32
    %c0_i32_1 = arith.constant 0 : i32
    return %arg0, %c0_i32, %c0_i32_0 : i32, i32, i32
  }
  func.func @transform_1(%arg0: i32) -> (i32, i32) {
    %c0_i32 = arith.constant 0 : i32
    %c0_i32_0 = arith.constant 0 : i32
    %c0_i32_1 = arith.constant 0 : i32
    return %c0_i32, %c0_i32_0 : i32, i32
  }
  func.func @transform_2(%arg0: i32) -> (i32, i32) {
    %c0_i32 = arith.constant 0 : i32
    %c0_i32_0 = arith.constant 0 : i32
    %c0_i32_1 = arith.constant 0 : i32
    return %c0_i32, %c0_i32_0 : i32, i32
  }
  func.func @transform_3(%arg0: i32) -> (i32, i32) {
    %c0_i32 = arith.constant 0 : i32
    %c0_i32_0 = arith.constant 0 : i32
    %c0_i32_1 = arith.constant 0 : i32
    return %c0_i32, %c0_i32_0 : i32, i32
  }
  func.func @transform_4(%arg0: i32) -> (i32, i32) {
    %c0_i32 = arith.constant 0 : i32
    %c0_i32_0 = arith.constant 0 : i32
    %c0_i32_1 = arith.constant 0 : i32
    return %c0_i32, %c0_i32_0 : i32, i32
  }
  func.func @transform_5(%arg0: i32) -> (i32, i32) {
    %c0_i32 = arith.constant 0 : i32
    %c0_i32_0 = arith.constant 0 : i32
    %c0_i32_1 = arith.constant 0 : i32
    return %c0_i32, %c0_i32_0 : i32, i32
  }
  func.func @transform_6(%arg0: i32) -> (i32, i32) {
    %c0_i32 = arith.constant 0 : i32
    %c0_i32_0 = arith.constant 0 : i32
    %c0_i32_1 = arith.constant 0 : i32
    return %c0_i32, %c0_i32_0 : i32, i32
  }
  func.func @transform_7(%arg0: i32) -> (i32, i32) {
    %c0_i32 = arith.constant 0 : i32
    %c0_i32_0 = arith.constant 0 : i32
    %c0_i32_1 = arith.constant 0 : i32
    return %c0_i32, %c0_i32_0 : i32, i32
  }
  func.func @transform_8(%arg0: i32) -> (i32, i32) {
    %c0_i32 = arith.constant 0 : i32
    %c0_i32_0 = arith.constant 0 : i32
    %c0_i32_1 = arith.constant 0 : i32
    return %c0_i32, %c0_i32_0 : i32, i32
  }
  func.func @transform_9(%arg0: i32) -> (i32, i32) {
    %c0_i32 = arith.constant 0 : i32
    %c0_i32_0 = arith.constant 0 : i32
    %c0_i32_1 = arith.constant 0 : i32
    return %c0_i32, %c0_i32_0 : i32, i32
  }
  func.func @transform_10(%arg0: i32) -> (i32, i32) {
    %c0_i32 = arith.constant 0 : i32
    %c0_i32_0 = arith.constant 0 : i32
    %c0_i32_1 = arith.constant 0 : i32
    return %c0_i32, %c0_i32_0 : i32, i32
  }
  func.func @transform_11(%arg0: i32) -> (i32, i32) {
    %c0_i32 = arith.constant 0 : i32
    %c0_i32_0 = arith.constant 0 : i32
    %c0_i32_1 = arith.constant 0 : i32
    return %c0_i32, %c0_i32_0 : i32, i32
  }
  func.func @transform_12(%arg0: i32) -> (i32, i32, i32) {
    %c0_i32 = arith.constant 0 : i32
    %c0_i32_0 = arith.constant 0 : i32
    %c0_i32_1 = arith.constant 0 : i32
    return %arg0, %c0_i32, %c0_i32_0 : i32, i32, i32
  }
}

</mosaic_0001>

<llo_original>
// kernel: tpu_custom_call.1
$region0: #{tpu_custom_call.1}
  #allocation0 [shape = 'u32[]', space=smem, size = 0x4, offset = 0x4, fixed_abs, tag = 'smem constant byte address 0x4 - core index']
  #allocation1 [shape = 'u32[144,128]{1,0:T(1,128)}', space=vmem, size = 0x12000, scoped, tag = 'internal scratch']
  %s0 = inlined_call_operand.vmem [shape: f32[2,8,32], index: 0, kind: input, shape index: {}]
  %s1 = inlined_call_operand.vmem [shape: f32[1,32], index: 1, kind: input, shape index: {}]
  %s2 = inlined_call_operand.vmem [shape: f32[1,32], index: 2, kind: input, shape index: {}]
  %s3 = inlined_call_operand.vmem [shape: f32[32,96], index: 3, kind: input, shape index: {}]
  %s4 = inlined_call_operand.vmem [shape: f32[32,32], index: 4, kind: input, shape index: {}]
  %s5 = inlined_call_operand.vmem [shape: f32[1,32], index: 5, kind: input, shape index: {}]
  %s6 = inlined_call_operand.vmem [shape: f32[1,32], index: 6, kind: input, shape index: {}]
  %s7 = inlined_call_operand.vmem [shape: f32[1,32], index: 7, kind: input, shape index: {}]
  %s8 = inlined_call_operand.vmem [shape: f32[32,128], index: 8, kind: input, shape index: {}]
  %s9 = inlined_call_operand.vmem [shape: f32[1,128], index: 9, kind: input, shape index: {}]
  %s10 = inlined_call_operand.vmem [shape: f32[128,32], index: 10, kind: input, shape index: {}]
  %s11 = inlined_call_operand.vmem [shape: f32[1,32], index: 11, kind: input, shape index: {}]
  %s12 = inlined_call_operand.hbm [shape: f32[2,8,32], index: 12, kind: output, shape index: {}]
  %s13 = sld [smem:[#allocation0]]
  $region81: #{tpu_custom_call.1} parent=0
    _
  %s15 = ssub.s32 1, %s13
  %s16 = scalar_select 0, %s15, %s13
  $region1: #{tpu_custom_call.1} parent=0
    #allocation2 [shape = 'u8[8192]{0}', space=vmem, size = 0x2000, scoped, tag = 'output window, operand 0']
    #allocation3 [shape = 's32[2]{0}', space=sflag, size = 0x8, scoped, tag = 'scoped memory for tpu_custom_call.1']
    %17 = vsyncpa [#allocation3], 0
    %s18 = scalar_lea.sflag [#allocation3], 1
    %19 = vsyncpa %s18, 0
    loop: start=0, step=1, limit=4
    $region2: #{tpu_custom_call.1} parent=1 // loop_pre_header
      _
    $region3: #{tpu_custom_call.1} parent=1 // loop_header
      %s21 = sphi 0, %s25
      %p22 = scmp.ge.s32.totalorder %s21, 4
      %s31 = sphi 0, %s33
      %s34 = sphi 0, %s31
      %s35 = sphi 0, %s34
      %s51 = sphi 0, %s35
      %s55 = sphi 0, %s55
      %s57 = sphi 0, %s55
      %s58 = sphi 0, %s57
      %s72 = sphi 0, %s58
      %s76 = sphi 0, %s76
      %s78 = sphi 0, %s76
      %s79 = sphi 0, %s78
      %s93 = sphi 0, %s79
      %s97 = sphi 0, %s97
      %s99 = sphi 0, %s97
      %s100 = sphi 0, %s99
      %s114 = sphi 0, %s100
      %s118 = sphi 0, %s118
      %s120 = sphi 0, %s118
      %s121 = sphi 0, %s120
      %s135 = sphi 0, %s121
      %s139 = sphi 0, %s139
      %s141 = sphi 0, %s139
      %s142 = sphi 0, %s141
      %s156 = sphi 0, %s142
      %s160 = sphi 0, %s160
      %s162 = sphi 0, %s160
      %s163 = sphi 0, %s162
      %s177 = sphi 0, %s163
      %s181 = sphi 0, %s181
      %s183 = sphi 0, %s181
      %s184 = sphi 0, %s183
      %s198 = sphi 0, %s184
      %s202 = sphi 0, %s202
      %s204 = sphi 0, %s202
      %s205 = sphi 0, %s204
      %s219 = sphi 0, %s205
      %s223 = sphi 0, %s223
      %s225 = sphi 0, %s223
      %s226 = sphi 0, %s225
      %s240 = sphi 0, %s226
      %s244 = sphi 0, %s244
      %s246 = sphi 0, %s244
      %s247 = sphi 0, %s246
      %s261 = sphi 0, %s247
      %s265 = sphi 0, %s265
      %s267 = sphi 0, %s265
      %s268 = sphi 0, %s267
      %s282 = sphi 0, %s268
      %s288 = sphi 0, %s290
      %s291 = sphi 0, %s288
      %s292 = sphi 0, %s291
      %s308 = sphi 0, %s292
    $region4: #{tpu_custom_call.1} parent=1 // loop_header_branch
      %24 = sbr.rel (%p22) target = $region8
    $region5: #{tpu_custom_call.1} parent=1 // loop_body
      %s26 = ssub.s32 %s21, 1
      %s27 = ssub.s32 %s21, 2
      %s28 = sadd.s32 %s21, 1
      %s29 = ssub.s32 %s21, %s28
      %p30 = scmp.eq.s32.totalorder %s29, 0
      %s32 = sadd.s32 %s31, 1
      %s33 = scalar_select %p30, %s31, %s32
      %p36 = pneg %p30
      %p37 = scmp.eq.s32.totalorder %s21, 1
      %p38 = por %p36, %p37
      %p39 = scmp.ne.s32.totalorder %s31, %s34
      %p40 = scmp.eq.s32.totalorder %s21, 0
      %p41 = por %p39, %p40
      %p42 = scmp.ne.s32.totalorder %s31, %s34
      %p43 = scmp.eq.s32.totalorder %s26, 1
      %p44 = por %p42, %p43
      %p45 = scmp.ne.s32.totalorder %s34, %s35
      %p46 = scmp.eq.s32.totalorder %s26, 0
      %p47 = por %p45, %p46
      %p48 = scmp.ne.s32.totalorder %s34, %s35
      %p49 = scmp.eq.s32.totalorder %s27, 1
      %p50 = por %p48, %p49
      %p52 = scmp.ne.s32.totalorder %s35, %s51
      %p53 = scmp.eq.s32.totalorder %s27, 0
      %p54 = por %p52, %p53
      %s56 = sadd.s32 %s55, 1
      %p59 = scmp.eq.s32.totalorder %s21, 1
      %p60 = scmp.ne.s32.totalorder %s55, %s57
      %p61 = scmp.eq.s32.totalorder %s21, 0
      %p62 = por %p60, %p61
      %p63 = scmp.ne.s32.totalorder %s55, %s57
      %p64 = scmp.eq.s32.totalorder %s26, 1
      %p65 = por %p63, %p64
      %p66 = scmp.ne.s32.totalorder %s57, %s58
      %p67 = scmp.eq.s32.totalorder %s26, 0
      %p68 = por %p66, %p67
      %p69 = scmp.ne.s32.totalorder %s57, %s58
      %p70 = scmp.eq.s32.totalorder %s27, 1
      %p71 = por %p69, %p70
      %p73 = scmp.ne.s32.totalorder %s58, %s72
      %p74 = scmp.eq.s32.totalorder %s27, 0
      %p75 = por %p73, %p74
      %s77 = sadd.s32 %s76, 1
      %p80 = scmp.eq.s32.totalorder %s21, 1
      %p81 = scmp.ne.s32.totalorder %s76, %s78
      %p82 = scmp.eq.s32.totalorder %s21, 0
      %p83 = por %p81, %p82
      %p84 = scmp.ne.s32.totalorder %s76, %s78
      %p85 = scmp.eq.s32.totalorder %s26, 1
      %p86 = por %p84, %p85
      %p87 = scmp.ne.s32.totalorder %s78, %s79
      %p88 = scmp.eq.s32.totalorder %s26, 0
      %p89 = por %p87, %p88
      %p90 = scmp.ne.s32.totalorder %s78, %s79
      %p91 = scmp.eq.s32.totalorder %s27, 1
      %p92 = por %p90, %p91
      %p94 = scmp.ne.s32.totalorder %s79, %s93
      %p95 = scmp.eq.s32.totalorder %s27, 0
      %p96 = por %p94, %p95
      %s98 = sadd.s32 %s97, 1
      %p101 = scmp.eq.s32.totalorder %s21, 1
      %p102 = scmp.ne.s32.totalorder %s97, %s99
      %p103 = scmp.eq.s32.totalorder %s21, 0
      %p104 = por %p102, %p103
      %p105 = scmp.ne.s32.totalorder %s97, %s99
      %p106 = scmp.eq.s32.totalorder %s26, 1
      %p107 = por %p105, %p106
      %p108 = scmp.ne.s32.totalorder %s99, %s100
      %p109 = scmp.eq.s32.totalorder %s26, 0
      %p110 = por %p108, %p109
      %p111 = scmp.ne.s32.totalorder %s99, %s100
      %p112 = scmp.eq.s32.totalorder %s27, 1
      %p113 = por %p111, %p112
      %p115 = scmp.ne.s32.totalorder %s100, %s114
      %p116 = scmp.eq.s32.totalorder %s27, 0
      %p117 = por %p115, %p116
      %s119 = sadd.s32 %s118, 1
      %p122 = scmp.eq.s32.totalorder %s21, 1
      %p123 = scmp.ne.s32.totalorder %s118, %s120
      %p124 = scmp.eq.s32.totalorder %s21, 0
      %p125 = por %p123, %p124
      %p126 = scmp.ne.s32.totalorder %s118, %s120
      %p127 = scmp.eq.s32.totalorder %s26, 1
      %p128 = por %p126, %p127
      %p129 = scmp.ne.s32.totalorder %s120, %s121
      %p130 = scmp.eq.s32.totalorder %s26, 0
      %p131 = por %p129, %p130
      %p132 = scmp.ne.s32.totalorder %s120, %s121
      %p133 = scmp.eq.s32.totalorder %s27, 1
      %p134 = por %p132, %p133
      %p136 = scmp.ne.s32.totalorder %s121, %s135
      %p137 = scmp.eq.s32.totalorder %s27, 0
      %p138 = por %p136, %p137
      %s140 = sadd.s32 %s139, 1
      %p143 = scmp.eq.s32.totalorder %s21, 1
      %p144 = scmp.ne.s32.totalorder %s139, %s141
      %p145 = scmp.eq.s32.totalorder %s21, 0
      %p146 = por %p144, %p145
      %p147 = scmp.ne.s32.totalorder %s139, %s141
      %p148 = scmp.eq.s32.totalorder %s26, 1
      %p149 = por %p147, %p148
      %p150 = scmp.ne.s32.totalorder %s141, %s142
      %p151 = scmp.eq.s32.totalorder %s26, 0
      %p152 = por %p150, %p151
      %p153 = scmp.ne.s32.totalorder %s141, %s142
      %p154 = scmp.eq.s32.totalorder %s27, 1
      %p155 = por %p153, %p154
      %p157 = scmp.ne.s32.totalorder %s142, %s156
      %p158 = scmp.eq.s32.totalorder %s27, 0
      %p159 = por %p157, %p158
      %s161 = sadd.s32 %s160, 1
      %p164 = scmp.eq.s32.totalorder %s21, 1
      %p165 = scmp.ne.s32.totalorder %s160, %s162
      %p166 = scmp.eq.s32.totalorder %s21, 0
      %p167 = por %p165, %p166
      %p168 = scmp.ne.s32.totalorder %s160, %s162
      %p169 = scmp.eq.s32.totalorder %s26, 1
      %p170 = por %p168, %p169
      %p171 = scmp.ne.s32.totalorder %s162, %s163
      %p172 = scmp.eq.s32.totalorder %s26, 0
      %p173 = por %p171, %p172
      %p174 = scmp.ne.s32.totalorder %s162, %s163
      %p175 = scmp.eq.s32.totalorder %s27, 1
      %p176 = por %p174, %p175
      %p178 = scmp.ne.s32.totalorder %s163, %s177
      %p179 = scmp.eq.s32.totalorder %s27, 0
      %p180 = por %p178, %p179
      %s182 = sadd.s32 %s181, 1
      %p185 = scmp.eq.s32.totalorder %s21, 1
      %p186 = scmp.ne.s32.totalorder %s181, %s183
      %p187 = scmp.eq.s32.totalorder %s21, 0
      %p188 = por %p186, %p187
      %p189 = scmp.ne.s32.totalorder %s181, %s183
      %p190 = scmp.eq.s32.totalorder %s26, 1
      %p191 = por %p189, %p190
      %p192 = scmp.ne.s32.totalorder %s183, %s184
      %p193 = scmp.eq.s32.totalorder %s26, 0
      %p194 = por %p192, %p193
      %p195 = scmp.ne.s32.totalorder %s183, %s184
      %p196 = scmp.eq.s32.totalorder %s27, 1
      %p197 = por %p195, %p196
      %p199 = scmp.ne.s32.totalorder %s184, %s198
      %p200 = scmp.eq.s32.totalorder %s27, 0
      %p201 = por %p199, %p200
      %s203 = sadd.s32 %s202, 1
      %p206 = scmp.eq.s32.totalorder %s21, 1
      %p207 = scmp.ne.s32.totalorder %s202, %s204
      %p208 = scmp.eq.s32.totalorder %s21, 0
      %p209 = por %p207, %p208
      %p210 = scmp.ne.s32.totalorder %s202, %s204
      %p211 = scmp.eq.s32.totalorder %s26, 1
      %p212 = por %p210, %p211
      %p213 = scmp.ne.s32.totalorder %s204, %s205
      %p214 = scmp.eq.s32.totalorder %s26, 0
      %p215 = por %p213, %p214
      %p216 = scmp.ne.s32.totalorder %s204, %s205
      %p217 = scmp.eq.s32.totalorder %s27, 1
      %p218 = por %p216, %p217
      %p220 = scmp.ne.s32.totalorder %s205, %s219
      %p221 = scmp.eq.s32.totalorder %s27, 0
      %p222 = por %p220, %p221
      %s224 = sadd.s32 %s223, 1
      %p227 = scmp.eq.s32.totalorder %s21, 1
      %p228 = scmp.ne.s32.totalorder %s223, %s225
      %p229 = scmp.eq.s32.totalorder %s21, 0
      %p230 = por %p228, %p229
      %p231 = scmp.ne.s32.totalorder %s223, %s225
      %p232 = scmp.eq.s32.totalorder %s26, 1
      %p233 = por %p231, %p232
      %p234 = scmp.ne.s32.totalorder %s225, %s226
      %p235 = scmp.eq.s32.totalorder %s26, 0
      %p236 = por %p234, %p235
      %p237 = scmp.ne.s32.totalorder %s225, %s226
      %p238 = scmp.eq.s32.totalorder %s27, 1
      %p239 = por %p237, %p238
      %p241 = scmp.ne.s32.totalorder %s226, %s240
      %p242 = scmp.eq.s32.totalorder %s27, 0
      %p243 = por %p241, %p242
      %s245 = sadd.s32 %s244, 1
      %p248 = scmp.eq.s32.totalorder %s21, 1
      %p249 = scmp.ne.s32.totalorder %s244, %s246
      %p250 = scmp.eq.s32.totalorder %s21, 0
      %p251 = por %p249, %p250
      %p252 = scmp.ne.s32.totalorder %s244, %s246
      %p253 = scmp.eq.s32.totalorder %s26, 1
      %p254 = por %p252, %p253
      %p255 = scmp.ne.s32.totalorder %s246, %s247
      %p256 = scmp.eq.s32.totalorder %s26, 0
      %p257 = por %p255, %p256
      %p258 = scmp.ne.s32.totalorder %s246, %s247
      %p259 = scmp.eq.s32.totalorder %s27, 1
      %p260 = por %p258, %p259
      %p262 = scmp.ne.s32.totalorder %s247, %s261
      %p263 = scmp.eq.s32.totalorder %s27, 0
      %p264 = por %p262, %p263
      %s266 = sadd.s32 %s265, 1
      %p269 = scmp.eq.s32.totalorder %s21, 1
      %p270 = scmp.ne.s32.totalorder %s265, %s267
      %p271 = scmp.eq.s32.totalorder %s21, 0
      %p272 = por %p270, %p271
      %p273 = scmp.ne.s32.totalorder %s265, %s267
      %p274 = scmp.eq.s32.totalorder %s26, 1
      %p275 = por %p273, %p274
      %p276 = scmp.ne.s32.totalorder %s267, %s268
      %p277 = scmp.eq.s32.totalorder %s26, 0
      %p278 = por %p276, %p277
      %p279 = scmp.ne.s32.totalorder %s267, %s268
      %p280 = scmp.eq.s32.totalorder %s27, 1
      %p281 = por %p279, %p280
      %p283 = scmp.ne.s32.totalorder %s268, %s282
      %p284 = scmp.eq.s32.totalorder %s27, 0
      %p285 = por %p283, %p284
      %s286 = ssub.s32 %s21, %s28
      %p287 = scmp.eq.s32.totalorder %s286, 0
      %s289 = sadd.s32 %s288, 1
      %s290 = scalar_select %p287, %s288, %s289
      %p293 = pneg %p287
      %p294 = scmp.eq.s32.totalorder %s21, 1
      %p295 = por %p293, %p294
      %p296 = scmp.ne.s32.totalorder %s288, %s291
      %p297 = scmp.eq.s32.totalorder %s21, 0
      %p298 = por %p296, %p297
      %p299 = scmp.ne.s32.totalorder %s288, %s291
      %p300 = scmp.eq.s32.totalorder %s26, 1
      %p301 = por %p299, %p300
      %p302 = scmp.ne.s32.totalorder %s291, %s292
      %p303 = scmp.eq.s32.totalorder %s26, 0
      %p304 = por %p302, %p303
      %p305 = scmp.ne.s32.totalorder %s291, %s292
      %p306 = scmp.eq.s32.totalorder %s27, 1
      %p307 = por %p305, %p306
      %p309 = scmp.ne.s32.totalorder %s292, %s308
      %p310 = scmp.eq.s32.totalorder %s27, 0
      %p311 = por %p309, %p310
      %p312 = scmp.le.s32.totalorder 1, %s21
      %p313 = scmp.lt.s32.totalorder %s21, 3
      %p314 = pnand %p312, %p313
      %p315 = pneg %p314
      // Predicated region
      $region9: #{tpu_custom_call.1} parent=5 // pred_check
        _
      $region10: #{tpu_custom_call.1} parent=5 // pred_check_branch
        %317 = sbr.rel (%p314) target = $region12
      $region11: #{tpu_custom_call.1} parent=5 // pred_region
        %s318 = ssub.s32 %s21, 1
        // Predicated region
        $region13: #{tpu_custom_call.1} parent=11 // pred_check
          %p319 = pneg %p68
        $region14: #{tpu_custom_call.1} parent=11 // pred_check_branch
          %321 = sbr.rel (%p319) target = $region16
        $region15: #{tpu_custom_call.1} parent=11 // pred_region
          _
        $region16: #{tpu_custom_call.1} parent=11 // pred_fallthru
          _
        // Predicated region
        $region17: #{tpu_custom_call.1} parent=11 // pred_check
          %p322 = pneg %p89
        $region18: #{tpu_custom_call.1} parent=11 // pred_check_branch
          %324 = sbr.rel (%p322) target = $region20
        $region19: #{tpu_custom_call.1} parent=11 // pred_region
          _
        $region20: #{tpu_custom_call.1} parent=11 // pred_fallthru
          _
        // Predicated region
        $region21: #{tpu_custom_call.1} parent=11 // pred_check
          %p325 = pneg %p110
        $region22: #{tpu_custom_call.1} parent=11 // pred_check_branch
          %327 = sbr.rel (%p325) target = $region24
        $region23: #{tpu_custom_call.1} parent=11 // pred_region
          _
        $region24: #{tpu_custom_call.1} parent=11 // pred_fallthru
          _
        // Predicated region
        $region25: #{tpu_custom_call.1} parent=11 // pred_check
          %p328 = pneg %p131
        $region26: #{tpu_custom_call.1} parent=11 // pred_check_branch
          %330 = sbr.rel (%p328) target = $region28
        $region27: #{tpu_custom_call.1} parent=11 // pred_region
          _
        $region28: #{tpu_custom_call.1} parent=11 // pred_fallthru
          _
        // Predicated region
        $region29: #{tpu_custom_call.1} parent=11 // pred_check
          %p331 = pneg %p152
        $region30: #{tpu_custom_call.1} parent=11 // pred_check_branch
          %333 = sbr.rel (%p331) target = $region32
        $region31: #{tpu_custom_call.1} parent=11 // pred_region
          _
        $region32: #{tpu_custom_call.1} parent=11 // pred_fallthru
          _
        // Predicated region
        $region33: #{tpu_custom_call.1} parent=11 // pred_check
          %p334 = pneg %p173
        $region34: #{tpu_custom_call.1} parent=11 // pred_check_branch
          %336 = sbr.rel (%p334) target = $region36
        $region35: #{tpu_custom_call.1} parent=11 // pred_region
          _
        $region36: #{tpu_custom_call.1} parent=11 // pred_fallthru
          _
        // Predicated region
        $region37: #{tpu_custom_call.1} parent=11 // pred_check
          %p337 = pneg %p194
        $region38: #{tpu_custom_call.1} parent=11 // pred_check_branch
          %339 = sbr.rel (%p337) target = $region40
        $region39: #{tpu_custom_call.1} parent=11 // pred_region
          _
        $region40: #{tpu_custom_call.1} parent=11 // pred_fallthru
          _
        // Predicated region
        $region41: #{tpu_custom_call.1} parent=11 // pred_check
          %p340 = pneg %p215
        $region42: #{tpu_custom_call.1} parent=11 // pred_check_branch
          %342 = sbr.rel (%p340) target = $region44
        $region43: #{tpu_custom_call.1} parent=11 // pred_region
          _
        $region44: #{tpu_custom_call.1} parent=11 // pred_fallthru
          _
        // Predicated region
        $region45: #{tpu_custom_call.1} parent=11 // pred_check
          %p343 = pneg %p236
        $region46: #{tpu_custom_call.1} parent=11 // pred_check_branch
          %345 = sbr.rel (%p343) target = $region48
        $region47: #{tpu_custom_call.1} parent=11 // pred_region
          _
        $region48: #{tpu_custom_call.1} parent=11 // pred_fallthru
          _
        // Predicated region
        $region49: #{tpu_custom_call.1} parent=11 // pred_check
          %p346 = pneg %p257
        $region50: #{tpu_custom_call.1} parent=11 // pred_check_branch
          %348 = sbr.rel (%p346) target = $region52
        $region51: #{tpu_custom_call.1} parent=11 // pred_region
          _
        $region52: #{tpu_custom_call.1} parent=11 // pred_fallthru
          _
        // Predicated region
        $region53: #{tpu_custom_call.1} parent=11 // pred_check
          %p349 = pneg %p278
        $region54: #{tpu_custom_call.1} parent=11 // pred_check_branch
          %351 = sbr.rel (%p349) target = $region56
        $region55: #{tpu_custom_call.1} parent=11 // pred_region
          _
        $region56: #{tpu_custom_call.1} parent=11 // pred_fallthru
          _
      $region12: #{tpu_custom_call.1} parent=5 // pred_fallthru
        _
      %p352 = scmp.lt.s32.totalorder %s21, 2
      // Predicated region
      $region57: #{tpu_custom_call.1} parent=5 // pred_check
        %p353 = pneg %p352
      $region58: #{tpu_custom_call.1} parent=5 // pred_check_branch
        %355 = sbr.rel (%p353) target = $region60
      $region59: #{tpu_custom_call.1} parent=5 // pred_region
        // Predicated region
        $region61: #{tpu_custom_call.1} parent=59 // pred_check
          %p356 = pneg %p41
        $region62: #{tpu_custom_call.1} parent=59 // pred_check_branch
          %358 = sbr.rel (%p356) target = $region64
        $region63: #{tpu_custom_call.1} parent=59 // pred_region
          %p359 = scmp.lt.s32.totalorder %s21, 1
          %s360 = scalar_select %p359, %s21, 1
          %s361 = smul.addr %s360, 8
          %s362 = scalar_lea.vmem %s0, %s361
        $region64: #{tpu_custom_call.1} parent=59 // pred_fallthru
          _
      $region60: #{tpu_custom_call.1} parent=5 // pred_fallthru
        _
      %p363 = scmp.le.s32.totalorder 1, %s21
      %p364 = scmp.lt.s32.totalorder %s21, 3
      %p365 = pnand %p363, %p364
      %p366 = pneg %p365
      // Predicated region
      $region65: #{tpu_custom_call.1} parent=5 // pred_check
        _
      $region66: #{tpu_custom_call.1} parent=5 // pred_check_branch
        %368 = sbr.rel (%p365) target = $region68
      $region67: #{tpu_custom_call.1} parent=5 // pred_region
        %s369 = ssub.s32 %s21, 1
        %p370 = scmp.lt.s32.totalorder %s26, 1
        %s371 = scalar_select %p370, %s26, 1
        %s372 = smul.addr %s371, 8
        %s373 = scalar_lea.vmem %s0, %s372
        %p374 = pneg %p47
        %p375 = pneg %p44
        %p376 = pneg %p68
        %p377 = pneg %p65
        %p378 = pneg %p89
        %p379 = pneg %p86
        %p380 = pneg %p110
        %p381 = pneg %p107
        %p382 = pneg %p131
        %p383 = pneg %p128
        %p384 = pneg %p152
        %p385 = pneg %p149
        %p386 = pneg %p173
        %p387 = pneg %p170
        %p388 = pneg %p194
        %p389 = pneg %p191
        %p390 = pneg %p215
        %p391 = pneg %p212
        %p392 = pneg %p236
        %p393 = pneg %p233
        %p394 = pneg %p257
        %p395 = pneg %p254
        %p396 = pneg %p278
        %p397 = pneg %p275
        %p398 = pneg %p304
        %p399 = pneg %p301
        %s400 = sand.u32 %s291, 1
        %s401 = scalar_lea.sflag [#allocation3], %s400
        %s402 = sand.u32 %s291, 1
        %s403 = smul.addr %s402, 8
        %s404 = scalar_lea.vmem [#allocation2], %s403
        %p405 = scmp.lt.s32.totalorder %s26, 1
        %s406 = scalar_select %p405, %s26, 1
        %s407 = smul.addr %s406, 8
        %s408 = scalar_lea.vmem %s0, %s407
        %v409 = vld [vmem:[%s408] sm:$0xff]
        %v410 = vld [vmem:[%s1] sm:$0x1]
        %v411 = vld [vmem:[%s2] sm:$0x1]
        %vm412 = vcmask 261120
        %v413 = vsel %vm412, %v409, 0.0
        %414 = vadd.xlane.f32.xlu0 %v413
        %v415 = vpop.xlane.xlu0 %414
        %v416 = vrcp.pop 32.0
        %v417 = vmul.f32 %v415, %v416
        %v418 = vsub.f32 %v409, %v417
        %v419 = vmul.f32 %v418, %v418
        %v420 = vsel %vm412, %v419, 0.0
        %421 = vadd.xlane.f32.xlu0 %v420
        %v422 = vpop.xlane.xlu0 %421
        %v423 = vmul.f32 %v422, %v416
        %v424 = vadd.f32 %v423, 1e-06
        %v425 = vrsqrt.pop %v424
        %v426 = vmul.f32 %v418, %v425
        %v428 = vlaneseq
        %v429 = vshrl.u32 %v428, 7
        %v430 = vsub.s32 0, %v429
        %v431 = vrot.slane %v410, %v430
        %v433 = vmul.f32 %v426, %v431
        %v435 = vlaneseq
        %v436 = vshrl.u32 %v435, 7
        %v437 = vsub.s32 0, %v436
        %v438 = vrot.slane %v411, %v437
        %v440 = vadd.f32 %v433, %v438
        %v441 = vld [vmem:[%s3] sm:$0xff]
        %v442 = vld [vmem:[%s3 + $0x8] sm:$0xff]
        %v443 = vld [vmem:[%s3 + $0x10] sm:$0xff]
        %v444 = vld [vmem:[%s3 + $0x18] sm:$0xff]
        %v446 = vsel %vm412, %v440, 0
        %448 = vmatprep.subr.mxu0 0.0
        %449 = vmatpush1.msra.mxu0 %v441
        %450 = vmatprep.subr.mxu0 0.0
        %451 = vmatpush1.msra.mxu0 %v442
        %452 = vmatprep.subr.mxu0 0.0
        %453 = vmatpush1.msra.mxu0 %v443
        %454 = vmatprep.subr.mxu0 0.0
        %455 = vmatpush1.msra.mxu0 %v444
        %456 = vmatprep.subr.mxu0 0.0
        %457 = vmatpush1.msra.mxu0 0.0
        %458 = vmatprep.subr.mxu0 0.0
        %459 = vmatpush1.msra.mxu0 0.0
        %460 = vmatprep.subr.mxu0 0.0
        %461 = vmatpush1.msra.mxu0 0.0
        %462 = vmatprep.subr.mxu0 0.0
        %463 = vmatpush1.msra.mxu0 0.0
        %464 = vmatprep.subr.mxu0 0.0
        %465 = vmatpush1.msra.mxu0 0.0
        %466 = vmatprep.subr.mxu0 0.0
        %467 = vmatpush1.msra.mxu0 0.0
        %468 = vmatprep.subr.mxu0 0.0
        %469 = vmatpush1.msra.mxu0 0.0
        %470 = vmatprep.subr.mxu0 0.0
        %471 = vmatpush1.msra.mxu0 0.0
        %472 = vmatprep.subr.mxu0 0.0
        %473 = vmatpush1.msra.mxu0 0.0
        %474 = vmatprep.subr.mxu0 0.0
        %475 = vmatpush1.msra.mxu0 0.0
        %476 = vmatprep.subr.mxu0 0.0
        %477 = vmatpush1.msra.mxu0 0.0
        %478 = vmatprep.subr.mxu0 0.0
        %479 = vmatpush1.msra.mxu0 0.0
        %480 = vmatprep.subr.mxu0 0.0
        %481 = vmatpush1.msra.mxu0 0.0
        %482 = vmatprep.subr.mxu0 0.0
        %483 = vmatpush1.msra.mxu0 0.0
        %484 = vmatprep.subr.mxu0 0.0
        %485 = vmatpush1.msra.mxu0 0.0
        %486 = vmatprep.subr.mxu0 0.0
        %487 = vmatpush1.msra.mxu0 0.0
        %488 = vmatprep.subr.mxu0 0.0
        %489 = vmatpush1.msra.mxu0 0.0
        %490 = vmatprep.subr.mxu0 0.0
        %491 = vmatpush1.msra.mxu0 0.0
        %492 = vmatprep.subr.mxu0 0.0
        %493 = vmatpush1.msra.mxu0 0.0
        %494 = vmatprep.subr.mxu0 0.0
        %495 = vmatpush1.msra.mxu0 0.0
        %496 = vmatprep.subr.mxu0 0.0
        %497 = vmatpush1.msra.mxu0 0.0
        %498 = vmatprep.subr.mxu0 0.0
        %499 = vmatpush1.msra.mxu0 0.0
        %500 = vmatprep.subr.mxu0 0.0
        %501 = vmatpush1.msra.mxu0 0.0
        %502 = vmatprep.subr.mxu0 0.0
        %503 = vmatpush1.msra.mxu0 0.0
        %504 = vmatprep.subr.mxu0 0.0
        %505 = vmatpush1.msra.mxu0 0.0
        %506 = vmatprep.subr.mxu0 0.0
        %507 = vmatpush1.msra.mxu0 0.0
        %508 = vmatprep.subr.mxu0 0.0
        %509 = vmatpush1.msra.mxu0 0.0
        %510 = vmatprep.subr.mxu0 0.0
        %511 = vmatpush1.msra.mxu0 0.0
        %512 = vmatprep.mubr.f32.mxu0 0.0
        %513 = vmatmul.mubr.f32.gmra.mrb[0].mxu0 %v446
        %v514 = vpop.f32.mrb[0].mxu0
        %v515 = vadd.f32 0.0, %v514
        %v516 = vpop.f32.mrb[0].mxu0
        %517 = vdwg.mxu0
        %519 = vrot.lane.b32.xlu0 %v515, 96
        %v520 = vpop.permute.xlu0 %519
        %vm521 = vcmask 64512
        %v522 = vsel %vm521, %v515, 0
        %v524 = vsel %vm521, %v520, 0
        %526 = vmatprep.subr.mxu0 0.0
        %527 = vmatpush1.xpose.msra.mxu0 %v524
        %528 = vmatprep.subr.mxu0 0.0
        %529 = vmatpush1.xpose.msra.mxu0 0.0
        %530 = vmatprep.subr.mxu0 0.0
        %531 = vmatpush1.xpose.msra.mxu0 0.0
        %532 = vmatprep.subr.mxu0 0.0
        %533 = vmatpush1.xpose.msra.mxu0 0.0
        %534 = vmatprep.subr.mxu0 0.0
        %535 = vmatpush1.xpose.msra.mxu0 0.0
        %536 = vmatprep.subr.mxu0 0.0
        %537 = vmatpush1.xpose.msra.mxu0 0.0
        %538 = vmatprep.subr.mxu0 0.0
        %539 = vmatpush1.xpose.msra.mxu0 0.0
        %540 = vmatprep.subr.mxu0 0.0
        %541 = vmatpush1.xpose.msra.mxu0 0.0
        %542 = vmatprep.subr.mxu0 0.0
        %543 = vmatpush1.xpose.msra.mxu0 0.0
        %544 = vmatprep.subr.mxu0 0.0
        %545 = vmatpush1.xpose.msra.mxu0 0.0
        %546 = vmatprep.subr.mxu0 0.0
        %547 = vmatpush1.xpose.msra.mxu0 0.0
        %548 = vmatprep.subr.mxu0 0.0
        %549 = vmatpush1.xpose.msra.mxu0 0.0
        %550 = vmatprep.subr.mxu0 0.0
        %551 = vmatpush1.xpose.msra.mxu0 0.0
        %552 = vmatprep.subr.mxu0 0.0
        %553 = vmatpush1.xpose.msra.mxu0 0.0
        %554 = vmatprep.subr.mxu0 0.0
        %555 = vmatpush1.xpose.msra.mxu0 0.0
        %556 = vmatprep.subr.mxu0 0.0
        %557 = vmatpush1.xpose.msra.mxu0 0.0
        %558 = vmatprep.subr.mxu0 0.0
        %559 = vmatpush1.xpose.msra.mxu0 0.0
        %560 = vmatprep.subr.mxu0 0.0
        %561 = vmatpush1.xpose.msra.mxu0 0.0
        %562 = vmatprep.subr.mxu0 0.0
        %563 = vmatpush1.xpose.msra.mxu0 0.0
        %564 = vmatprep.subr.mxu0 0.0
        %565 = vmatpush1.xpose.msra.mxu0 0.0
        %566 = vmatprep.subr.mxu0 0.0
        %567 = vmatpush1.xpose.msra.mxu0 0.0
        %568 = vmatprep.subr.mxu0 0.0
        %569 = vmatpush1.xpose.msra.mxu0 0.0
        %570 = vmatprep.subr.mxu0 0.0
        %571 = vmatpush1.xpose.msra.mxu0 0.0
        %572 = vmatprep.subr.mxu0 0.0
        %573 = vmatpush1.xpose.msra.mxu0 0.0
        %574 = vmatprep.subr.mxu0 0.0
        %575 = vmatpush1.xpose.msra.mxu0 0.0
        %576 = vmatprep.subr.mxu0 0.0
        %577 = vmatpush1.xpose.msra.mxu0 0.0
        %578 = vmatprep.subr.mxu0 0.0
        %579 = vmatpush1.xpose.msra.mxu0 0.0
        %580 = vmatprep.subr.mxu0 0.0
        %581 = vmatpush1.xpose.msra.mxu0 0.0
        %582 = vmatprep.subr.mxu0 0.0
        %583 = vmatpush1.xpose.msra.mxu0 0.0
        %584 = vmatprep.subr.mxu0 0.0
        %585 = vmatpush1.xpose.msra.mxu0 0.0
        %586 = vmatprep.subr.mxu0 0.0
        %587 = vmatpush1.xpose.msra.mxu0 0.0
        %588 = vmatprep.subr.mxu0 0.0
        %589 = vmatpush1.xpose.msra.mxu0 0.0
        %590 = vmatprep.mubr.f32.mxu0 0.0
        %591 = vmatmul.mubr.f32.gmra.mrb[0].mxu0 %v522
        %v592 = vpop.f32.mrb[0].mxu0
        %v593 = vadd.f32 0.0, %v592
        %v594 = vpop.f32.mrb[0].mxu0
        %595 = vdwg.mxu0
        %v596 = vmul.f32 %v593, 0.35355338
        %v597 = vsel %vm521, %v596, -inf
        %598 = vmax.xlane.f32.xlu0 %v597
        %v599 = vpop.xlane.xlu0 %598
        %v600 = vsub.f32 %v596, %v599
        %v601 = vmul.f32 %v600, 1.442695
        %v602 = vpow.pop %v601
        %v603 = vsel %vm521, %v602, 0.0
        %604 = vadd.xlane.f32.xlu0 %v603
        %v605 = vpop.xlane.xlu0 %604
        %v606 = vrcp.pop %v605
        %v607 = vmul.f32 %v602, %v606
        %608 = vrot.lane.b32.xlu0 %v515, 64
        %v609 = vpop.permute.xlu0 %608
        %v612 = vsel %vm521, %v607, 0
        %614 = vmatprep.subr.mxu0 0.0
        %615 = vmatpush1.msra.mxu0 %v609
        %616 = vmatprep.subr.mxu0 0.0
        %617 = vmatpush1.msra.mxu0 0.0
        %618 = vmatprep.subr.mxu0 0.0
        %619 = vmatpush1.msra.mxu0 0.0
        %620 = vmatprep.subr.mxu0 0.0
        %621 = vmatpush1.msra.mxu0 0.0
        %622 = vmatprep.subr.mxu0 0.0
        %623 = vmatpush1.msra.mxu0 0.0
        %624 = vmatprep.subr.mxu0 0.0
        %625 = vmatpush1.msra.mxu0 0.0
        %626 = vmatprep.subr.mxu0 0.0
        %627 = vmatpush1.msra.mxu0 0.0
        %628 = vmatprep.subr.mxu0 0.0
        %629 = vmatpush1.msra.mxu0 0.0
        %630 = vmatprep.subr.mxu0 0.0
        %631 = vmatpush1.msra.mxu0 0.0
        %632 = vmatprep.subr.mxu0 0.0
        %633 = vmatpush1.msra.mxu0 0.0
        %634 = vmatprep.subr.mxu0 0.0
        %635 = vmatpush1.msra.mxu0 0.0
        %636 = vmatprep.subr.mxu0 0.0
        %637 = vmatpush1.msra.mxu0 0.0
        %638 = vmatprep.subr.mxu0 0.0
        %639 = vmatpush1.msra.mxu0 0.0
        %640 = vmatprep.subr.mxu0 0.0
        %641 = vmatpush1.msra.mxu0 0.0
        %642 = vmatprep.subr.mxu0 0.0
        %643 = vmatpush1.msra.mxu0 0.0
        %644 = vmatprep.subr.mxu0 0.0
        %645 = vmatpush1.msra.mxu0 0.0
        %646 = vmatprep.subr.mxu0 0.0
        %647 = vmatpush1.msra.mxu0 0.0
        %648 = vmatprep.subr.mxu0 0.0
        %649 = vmatpush1.msra.mxu0 0.0
        %650 = vmatprep.subr.mxu0 0.0
        %651 = vmatpush1.msra.mxu0 0.0
        %652 = vmatprep.subr.mxu0 0.0
        %653 = vmatpush1.msra.mxu0 0.0
        %654 = vmatprep.subr.mxu0 0.0
        %655 = vmatpush1.msra.mxu0 0.0
        %656 = vmatprep.subr.mxu0 0.0
        %657 = vmatpush1.msra.mxu0 0.0
        %658 = vmatprep.subr.mxu0 0.0
        %659 = vmatpush1.msra.mxu0 0.0
        %660 = vmatprep.subr.mxu0 0.0
        %661 = vmatpush1.msra.mxu0 0.0
        %662 = vmatprep.subr.mxu0 0.0
        %663 = vmatpush1.msra.mxu0 0.0
        %664 = vmatprep.subr.mxu0 0.0
        %665 = vmatpush1.msra.mxu0 0.0
        %666 = vmatprep.subr.mxu0 0.0
        %667 = vmatpush1.msra.mxu0 0.0
        %668 = vmatprep.subr.mxu0 0.0
        %669 = vmatpush1.msra.mxu0 0.0
        %670 = vmatprep.subr.mxu0 0.0
        %671 = vmatpush1.msra.mxu0 0.0
        %672 = vmatprep.subr.mxu0 0.0
        %673 = vmatpush1.msra.mxu0 0.0
        %674 = vmatprep.subr.mxu0 0.0
        %675 = vmatpush1.msra.mxu0 0.0
        %676 = vmatprep.subr.mxu0 0.0
        %677 = vmatpush1.msra.mxu0 0.0
        %678 = vmatprep.mubr.f32.mxu0 0.0
        %679 = vmatmul.mubr.f32.gmra.mrb[0].mxu0 %v612
        %v680 = vpop.f32.mrb[0].mxu0
        %v681 = vadd.f32 0.0, %v680
        %v682 = vpop.f32.mrb[0].mxu0
        %683 = vdwg.mxu0
        %684 = vrot.lane.b32.xlu0 %v515, 120
        %v685 = vpop.permute.xlu0 %684
        %686 = vrot.lane.b32.xlu0 %v515, 88
        %v687 = vpop.permute.xlu0 %686
        %v688 = vsel %vm521, %v685, 0
        %v690 = vsel %vm521, %v687, 0
        %692 = vmatprep.subr.mxu0 0.0
        %693 = vmatpush1.xpose.msra.mxu0 %v690
        %694 = vmatprep.subr.mxu0 0.0
        %695 = vmatpush1.xpose.msra.mxu0 0.0
        %696 = vmatprep.subr.mxu0 0.0
        %697 = vmatpush1.xpose.msra.mxu0 0.0
        %698 = vmatprep.subr.mxu0 0.0
        %699 = vmatpush1.xpose.msra.mxu0 0.0
        %700 = vmatprep.subr.mxu0 0.0
        %701 = vmatpush1.xpose.msra.mxu0 0.0
        %702 = vmatprep.subr.mxu0 0.0
        %703 = vmatpush1.xpose.msra.mxu0 0.0
        %704 = vmatprep.subr.mxu0 0.0
        %705 = vmatpush1.xpose.msra.mxu0 0.0
        %706 = vmatprep.subr.mxu0 0.0
        %707 = vmatpush1.xpose.msra.mxu0 0.0
        %708 = vmatprep.subr.mxu0 0.0
        %709 = vmatpush1.xpose.msra.mxu0 0.0
        %710 = vmatprep.subr.mxu0 0.0
        %711 = vmatpush1.xpose.msra.mxu0 0.0
        %712 = vmatprep.subr.mxu0 0.0
        %713 = vmatpush1.xpose.msra.mxu0 0.0
        %714 = vmatprep.subr.mxu0 0.0
        %715 = vmatpush1.xpose.msra.mxu0 0.0
        %716 = vmatprep.subr.mxu0 0.0
        %717 = vmatpush1.xpose.msra.mxu0 0.0
        %718 = vmatprep.subr.mxu0 0.0
        %719 = vmatpush1.xpose.msra.mxu0 0.0
        %720 = vmatprep.subr.mxu0 0.0
        %721 = vmatpush1.xpose.msra.mxu0 0.0
        %722 = vmatprep.subr.mxu0 0.0
        %723 = vmatpush1.xpose.msra.mxu0 0.0
        %724 = vmatprep.subr.mxu0 0.0
        %725 = vmatpush1.xpose.msra.mxu0 0.0
        %726 = vmatprep.subr.mxu0 0.0
        %727 = vmatpush1.xpose.msra.mxu0 0.0
        %728 = vmatprep.subr.mxu0 0.0
        %729 = vmatpush1.xpose.msra.mxu0 0.0
        %730 = vmatprep.subr.mxu0 0.0
        %731 = vmatpush1.xpose.msra.mxu0 0.0
        %732 = vmatprep.subr.mxu0 0.0
        %733 = vmatpush1.xpose.msra.mxu0 0.0
        %734 = vmatprep.subr.mxu0 0.0
        %735 = vmatpush1.xpose.msra.mxu0 0.0
        %736 = vmatprep.subr.mxu0 0.0
        %737 = vmatpush1.xpose.msra.mxu0 0.0
        %738 = vmatprep.subr.mxu0 0.0
        %739 = vmatpush1.xpose.msra.mxu0 0.0
        %740 = vmatprep.subr.mxu0 0.0
        %741 = vmatpush1.xpose.msra.mxu0 0.0
        %742 = vmatprep.subr.mxu0 0.0
        %743 = vmatpush1.xpose.msra.mxu0 0.0
        %744 = vmatprep.subr.mxu0 0.0
        %745 = vmatpush1.xpose.msra.mxu0 0.0
        %746 = vmatprep.subr.mxu0 0.0
        %747 = vmatpush1.xpose.msra.mxu0 0.0
        %748 = vmatprep.subr.mxu0 0.0
        %749 = vmatpush1.xpose.msra.mxu0 0.0
        %750 = vmatprep.subr.mxu0 0.0
        %751 = vmatpush1.xpose.msra.mxu0 0.0
        %752 = vmatprep.subr.mxu0 0.0
        %753 = vmatpush1.xpose.msra.mxu0 0.0
        %754 = vmatprep.subr.mxu0 0.0
        %755 = vmatpush1.xpose.msra.mxu0 0.0
        %756 = vmatprep.mubr.f32.mxu0 0.0
        %757 = vmatmul.mubr.f32.gmra.mrb[0].mxu0 %v688
        %v758 = vpop.f32.mrb[0].mxu0
        %v759 = vadd.f32 0.0, %v758
        %v760 = vpop.f32.mrb[0].mxu0
        %761 = vdwg.mxu0
        %v762 = vmul.f32 %v759, 0.35355338
        %v763 = vsel %vm521, %v762, -inf
        %764 = vmax.xlane.f32.xlu0 %v763
        %v765 = vpop.xlane.xlu0 %764
        %v766 = vsub.f32 %v762, %v765
        %v767 = vmul.f32 %v766, 1.442695
        %v768 = vpow.pop %v767
        %v769 = vsel %vm521, %v768, 0.0
        %770 = vadd.xlane.f32.xlu0 %v769
        %v771 = vpop.xlane.xlu0 %770
        %v772 = vrcp.pop %v771
        %v773 = vmul.f32 %v768, %v772
        %774 = vrot.lane.b32.xlu0 %v515, 56
        %v775 = vpop.permute.xlu0 %774
        %v778 = vsel %vm521, %v773, 0
        %780 = vmatprep.subr.mxu0 0.0
        %781 = vmatpush1.msra.mxu0 %v775
        %782 = vmatprep.subr.mxu0 0.0
        %783 = vmatpush1.msra.mxu0 0.0
        %784 = vmatprep.subr.mxu0 0.0
        %785 = vmatpush1.msra.mxu0 0.0
        %786 = vmatprep.subr.mxu0 0.0
        %787 = vmatpush1.msra.mxu0 0.0
        %788 = vmatprep.subr.mxu0 0.0
        %789 = vmatpush1.msra.mxu0 0.0
        %790 = vmatprep.subr.mxu0 0.0
        %791 = vmatpush1.msra.mxu0 0.0
        %792 = vmatprep.subr.mxu0 0.0
        %793 = vmatpush1.msra.mxu0 0.0
        %794 = vmatprep.subr.mxu0 0.0
        %795 = vmatpush1.msra.mxu0 0.0
        %796 = vmatprep.subr.mxu0 0.0
        %797 = vmatpush1.msra.mxu0 0.0
        %798 = vmatprep.subr.mxu0 0.0
        %799 = vmatpush1.msra.mxu0 0.0
        %800 = vmatprep.subr.mxu0 0.0
        %801 = vmatpush1.msra.mxu0 0.0
        %802 = vmatprep.subr.mxu0 0.0
        %803 = vmatpush1.msra.mxu0 0.0
        %804 = vmatprep.subr.mxu0 0.0
        %805 = vmatpush1.msra.mxu0 0.0
        %806 = vmatprep.subr.mxu0 0.0
        %807 = vmatpush1.msra.mxu0 0.0
        %808 = vmatprep.subr.mxu0 0.0
        %809 = vmatpush1.msra.mxu0 0.0
        %810 = vmatprep.subr.mxu0 0.0
        %811 = vmatpush1.msra.mxu0 0.0
        %812 = vmatprep.subr.mxu0 0.0
        %813 = vmatpush1.msra.mxu0 0.0
        %814 = vmatprep.subr.mxu0 0.0
        %815 = vmatpush1.msra.mxu0 0.0
        %816 = vmatprep.subr.mxu0 0.0
        %817 = vmatpush1.msra.mxu0 0.0
        %818 = vmatprep.subr.mxu0 0.0
        %819 = vmatpush1.msra.mxu0 0.0
        %820 = vmatprep.subr.mxu0 0.0
        %821 = vmatpush1.msra.mxu0 0.0
        %822 = vmatprep.subr.mxu0 0.0
        %823 = vmatpush1.msra.mxu0 0.0
        %824 = vmatprep.subr.mxu0 0.0
        %825 = vmatpush1.msra.mxu0 0.0
        %826 = vmatprep.subr.mxu0 0.0
        %827 = vmatpush1.msra.mxu0 0.0
        %828 = vmatprep.subr.mxu0 0.0
        %829 = vmatpush1.msra.mxu0 0.0
        %830 = vmatprep.subr.mxu0 0.0
        %831 = vmatpush1.msra.mxu0 0.0
        %832 = vmatprep.subr.mxu0 0.0
        %833 = vmatpush1.msra.mxu0 0.0
        %834 = vmatprep.subr.mxu0 0.0
        %835 = vmatpush1.msra.mxu0 0.0
        %836 = vmatprep.subr.mxu0 0.0
        %837 = vmatpush1.msra.mxu0 0.0
        %838 = vmatprep.subr.mxu0 0.0
        %839 = vmatpush1.msra.mxu0 0.0
        %840 = vmatprep.subr.mxu0 0.0
        %841 = vmatpush1.msra.mxu0 0.0
        %842 = vmatprep.subr.mxu0 0.0
        %843 = vmatpush1.msra.mxu0 0.0
        %844 = vmatprep.mubr.f32.mxu0 0.0
        %845 = vmatmul.mubr.f32.gmra.mrb[0].mxu0 %v778
        %v846 = vpop.f32.mrb[0].mxu0
        %v847 = vadd.f32 0.0, %v846
        %v848 = vpop.f32.mrb[0].mxu0
        %849 = vdwg.mxu0
        %850 = vrot.lane.b32.xlu0 %v515, 112
        %v851 = vpop.permute.xlu0 %850
        %852 = vrot.lane.b32.xlu0 %v515, 80
        %v853 = vpop.permute.xlu0 %852
        %v854 = vsel %vm521, %v851, 0
        %v856 = vsel %vm521, %v853, 0
        %858 = vmatprep.subr.mxu0 0.0
        %859 = vmatpush1.xpose.msra.mxu0 %v856
        %860 = vmatprep.subr.mxu0 0.0
        %861 = vmatpush1.xpose.msra.mxu0 0.0
        %862 = vmatprep.subr.mxu0 0.0
        %863 = vmatpush1.xpose.msra.mxu0 0.0
        %864 = vmatprep.subr.mxu0 0.0
        %865 = vmatpush1.xpose.msra.mxu0 0.0
        %866 = vmatprep.subr.mxu0 0.0
        %867 = vmatpush1.xpose.msra.mxu0 0.0
        %868 = vmatprep.subr.mxu0 0.0
        %869 = vmatpush1.xpose.msra.mxu0 0.0
        %870 = vmatprep.subr.mxu0 0.0
        %871 = vmatpush1.xpose.msra.mxu0 0.0
        %872 = vmatprep.subr.mxu0 0.0
        %873 = vmatpush1.xpose.msra.mxu0 0.0
        %874 = vmatprep.subr.mxu0 0.0
        %875 = vmatpush1.xpose.msra.mxu0 0.0
        %876 = vmatprep.subr.mxu0 0.0
        %877 = vmatpush1.xpose.msra.mxu0 0.0
        %878 = vmatprep.subr.mxu0 0.0
        %879 = vmatpush1.xpose.msra.mxu0 0.0
        %880 = vmatprep.subr.mxu0 0.0
        %881 = vmatpush1.xpose.msra.mxu0 0.0
        %882 = vmatprep.subr.mxu0 0.0
        %883 = vmatpush1.xpose.msra.mxu0 0.0
        %884 = vmatprep.subr.mxu0 0.0
        %885 = vmatpush1.xpose.msra.mxu0 0.0
        %886 = vmatprep.subr.mxu0 0.0
        %887 = vmatpush1.xpose.msra.mxu0 0.0
        %888 = vmatprep.subr.mxu0 0.0
        %889 = vmatpush1.xpose.msra.mxu0 0.0
        %890 = vmatprep.subr.mxu0 0.0
        %891 = vmatpush1.xpose.msra.mxu0 0.0
        %892 = vmatprep.subr.mxu0 0.0
        %893 = vmatpush1.xpose.msra.mxu0 0.0
        %894 = vmatprep.subr.mxu0 0.0
        %895 = vmatpush1.xpose.msra.mxu0 0.0
        %896 = vmatprep.subr.mxu0 0.0
        %897 = vmatpush1.xpose.msra.mxu0 0.0
        %898 = vmatprep.subr.mxu0 0.0
        %899 = vmatpush1.xpose.msra.mxu0 0.0
        %900 = vmatprep.subr.mxu0 0.0
        %901 = vmatpush1.xpose.msra.mxu0 0.0
        %902 = vmatprep.subr.mxu0 0.0
        %903 = vmatpush1.xpose.msra.mxu0 0.0
        %904 = vmatprep.subr.mxu0 0.0
        %905 = vmatpush1.xpose.msra.mxu0 0.0
        %906 = vmatprep.subr.mxu0 0.0
        %907 = vmatpush1.xpose.msra.mxu0 0.0
        %908 = vmatprep.subr.mxu0 0.0
        %909 = vmatpush1.xpose.msra.mxu0 0.0
        %910 = vmatprep.subr.mxu0 0.0
        %911 = vmatpush1.xpose.msra.mxu0 0.0
        %912 = vmatprep.subr.mxu0 0.0
        %913 = vmatpush1.xpose.msra.mxu0 0.0
        %914 = vmatprep.subr.mxu0 0.0
        %915 = vmatpush1.xpose.msra.mxu0 0.0
        %916 = vmatprep.subr.mxu0 0.0
        %917 = vmatpush1.xpose.msra.mxu0 0.0
        %918 = vmatprep.subr.mxu0 0.0
        %919 = vmatpush1.xpose.msra.mxu0 0.0
        %920 = vmatprep.subr.mxu0 0.0
        %921 = vmatpush1.xpose.msra.mxu0 0.0
        %922 = vmatprep.mubr.f32.mxu0 0.0
        %923 = vmatmul.mubr.f32.gmra.mrb[0].mxu0 %v854
        %v924 = vpop.f32.mrb[0].mxu0
        %v925 = vadd.f32 0.0, %v924
        %v926 = vpop.f32.mrb[0].mxu0
        %927 = vdwg.mxu0
        %v928 = vmul.f32 %v925, 0.35355338
        %v929 = vsel %vm521, %v928, -inf
        %930 = vmax.xlane.f32.xlu0 %v929
        %v931 = vpop.xlane.xlu0 %930
        %v932 = vsub.f32 %v928, %v931
        %v933 = vmul.f32 %v932, 1.442695
        %v934 = vpow.pop %v933
        %v935 = vsel %vm521, %v934, 0.0
        %936 = vadd.xlane.f32.xlu0 %v935
        %v937 = vpop.xlane.xlu0 %936
        %v938 = vrcp.pop %v937
        %v939 = vmul.f32 %v934, %v938
        %940 = vrot.lane.b32.xlu0 %v515, 48
        %v941 = vpop.permute.xlu0 %940
        %v944 = vsel %vm521, %v939, 0
        %946 = vmatprep.subr.mxu0 0.0
        %947 = vmatpush1.msra.mxu0 %v941
        %948 = vmatprep.subr.mxu0 0.0
        %949 = vmatpush1.msra.mxu0 0.0
        %950 = vmatprep.subr.mxu0 0.0
        %951 = vmatpush1.msra.mxu0 0.0
        %952 = vmatprep.subr.mxu0 0.0
        %953 = vmatpush1.msra.mxu0 0.0
        %954 = vmatprep.subr.mxu0 0.0
        %955 = vmatpush1.msra.mxu0 0.0
        %956 = vmatprep.subr.mxu0 0.0
        %957 = vmatpush1.msra.mxu0 0.0
        %958 = vmatprep.subr.mxu0 0.0
        %959 = vmatpush1.msra.mxu0 0.0
        %960 = vmatprep.subr.mxu0 0.0
        %961 = vmatpush1.msra.mxu0 0.0
        %962 = vmatprep.subr.mxu0 0.0
        %963 = vmatpush1.msra.mxu0 0.0
        %964 = vmatprep.subr.mxu0 0.0
        %965 = vmatpush1.msra.mxu0 0.0
        %966 = vmatprep.subr.mxu0 0.0
        %967 = vmatpush1.msra.mxu0 0.0
        %968 = vmatprep.subr.mxu0 0.0
        %969 = vmatpush1.msra.mxu0 0.0
        %970 = vmatprep.subr.mxu0 0.0
        %971 = vmatpush1.msra.mxu0 0.0
        %972 = vmatprep.subr.mxu0 0.0
        %973 = vmatpush1.msra.mxu0 0.0
        %974 = vmatprep.subr.mxu0 0.0
        %975 = vmatpush1.msra.mxu0 0.0
        %976 = vmatprep.subr.mxu0 0.0
        %977 = vmatpush1.msra.mxu0 0.0
        %978 = vmatprep.subr.mxu0 0.0
        %979 = vmatpush1.msra.mxu0 0.0
        %980 = vmatprep.subr.mxu0 0.0
        %981 = vmatpush1.msra.mxu0 0.0
        %982 = vmatprep.subr.mxu0 0.0
        %983 = vmatpush1.msra.mxu0 0.0
        %984 = vmatprep.subr.mxu0 0.0
        %985 = vmatpush1.msra.mxu0 0.0
        %986 = vmatprep.subr.mxu0 0.0
        %987 = vmatpush1.msra.mxu0 0.0
        %988 = vmatprep.subr.mxu0 0.0
        %989 = vmatpush1.msra.mxu0 0.0
        %990 = vmatprep.subr.mxu0 0.0
        %991 = vmatpush1.msra.mxu0 0.0
        %992 = vmatprep.subr.mxu0 0.0
        %993 = vmatpush1.msra.mxu0 0.0
        %994 = vmatprep.subr.mxu0 0.0
        %995 = vmatpush1.msra.mxu0 0.0
        %996 = vmatprep.subr.mxu0 0.0
        %997 = vmatpush1.msra.mxu0 0.0
        %998 = vmatprep.subr.mxu0 0.0
        %999 = vmatpush1.msra.mxu0 0.0
        %1000 = vmatprep.subr.mxu0 0.0
        %1001 = vmatpush1.msra.mxu0 0.0
        %1002 = vmatprep.subr.mxu0 0.0
        %1003 = vmatpush1.msra.mxu0 0.0
        %1004 = vmatprep.subr.mxu0 0.0
        %1005 = vmatpush1.msra.mxu0 0.0
        %1006 = vmatprep.subr.mxu0 0.0
        %1007 = vmatpush1.msra.mxu0 0.0
        %1008 = vmatprep.subr.mxu0 0.0
        %1009 = vmatpush1.msra.mxu0 0.0
        %1010 = vmatprep.mubr.f32.mxu0 0.0
        %1011 = vmatmul.mubr.f32.gmra.mrb[0].mxu0 %v944
        %v1012 = vpop.f32.mrb[0].mxu0
        %v1013 = vadd.f32 0.0, %v1012
        %v1014 = vpop.f32.mrb[0].mxu0
        %1015 = vdwg.mxu0
        %1016 = vrot.lane.b32.xlu0 %v515, 104
        %v1017 = vpop.permute.xlu0 %1016
        %1018 = vrot.lane.b32.xlu0 %v515, 72
        %v1019 = vpop.permute.xlu0 %1018
        %v1020 = vsel %vm521, %v1017, 0
        %v1022 = vsel %vm521, %v1019, 0
        %1024 = vmatprep.subr.mxu0 0.0
        %1025 = vmatpush1.xpose.msra.mxu0 %v1022
        %1026 = vmatprep.subr.mxu0 0.0
        %1027 = vmatpush1.xpose.msra.mxu0 0.0
        %1028 = vmatprep.subr.mxu0 0.0
        %1029 = vmatpush1.xpose.msra.mxu0 0.0
        %1030 = vmatprep.subr.mxu0 0.0
        %1031 = vmatpush1.xpose.msra.mxu0 0.0
        %1032 = vmatprep.subr.mxu0 0.0
        %1033 = vmatpush1.xpose.msra.mxu0 0.0
        %1034 = vmatprep.subr.mxu0 0.0
        %1035 = vmatpush1.xpose.msra.mxu0 0.0
        %1036 = vmatprep.subr.mxu0 0.0
        %1037 = vmatpush1.xpose.msra.mxu0 0.0
        %1038 = vmatprep.subr.mxu0 0.0
        %1039 = vmatpush1.xpose.msra.mxu0 0.0
        %1040 = vmatprep.subr.mxu0 0.0
        %1041 = vmatpush1.xpose.msra.mxu0 0.0
        %1042 = vmatprep.subr.mxu0 0.0
        %1043 = vmatpush1.xpose.msra.mxu0 0.0
        %1044 = vmatprep.subr.mxu0 0.0
        %1045 = vmatpush1.xpose.msra.mxu0 0.0
        %1046 = vmatprep.subr.mxu0 0.0
        %1047 = vmatpush1.xpose.msra.mxu0 0.0
        %1048 = vmatprep.subr.mxu0 0.0
        %1049 = vmatpush1.xpose.msra.mxu0 0.0
        %1050 = vmatprep.subr.mxu0 0.0
        %1051 = vmatpush1.xpose.msra.mxu0 0.0
        %1052 = vmatprep.subr.mxu0 0.0
        %1053 = vmatpush1.xpose.msra.mxu0 0.0
        %1054 = vmatprep.subr.mxu0 0.0
        %1055 = vmatpush1.xpose.msra.mxu0 0.0
        %1056 = vmatprep.subr.mxu0 0.0
        %1057 = vmatpush1.xpose.msra.mxu0 0.0
        %1058 = vmatprep.subr.mxu0 0.0
        %1059 = vmatpush1.xpose.msra.mxu0 0.0
        %1060 = vmatprep.subr.mxu0 0.0
        %1061 = vmatpush1.xpose.msra.mxu0 0.0
        %1062 = vmatprep.subr.mxu0 0.0
        %1063 = vmatpush1.xpose.msra.mxu0 0.0
        %1064 = vmatprep.subr.mxu0 0.0
        %1065 = vmatpush1.xpose.msra.mxu0 0.0
        %1066 = vmatprep.subr.mxu0 0.0
        %1067 = vmatpush1.xpose.msra.mxu0 0.0
        %1068 = vmatprep.subr.mxu0 0.0
        %1069 = vmatpush1.xpose.msra.mxu0 0.0
        %1070 = vmatprep.subr.mxu0 0.0
        %1071 = vmatpush1.xpose.msra.mxu0 0.0
        %1072 = vmatprep.subr.mxu0 0.0
        %1073 = vmatpush1.xpose.msra.mxu0 0.0
        %1074 = vmatprep.subr.mxu0 0.0
        %1075 = vmatpush1.xpose.msra.mxu0 0.0
        %1076 = vmatprep.subr.mxu0 0.0
        %1077 = vmatpush1.xpose.msra.mxu0 0.0
        %1078 = vmatprep.subr.mxu0 0.0
        %1079 = vmatpush1.xpose.msra.mxu0 0.0
        %1080 = vmatprep.subr.mxu0 0.0
        %1081 = vmatpush1.xpose.msra.mxu0 0.0
        %1082 = vmatprep.subr.mxu0 0.0
        %1083 = vmatpush1.xpose.msra.mxu0 0.0
        %1084 = vmatprep.subr.mxu0 0.0
        %1085 = vmatpush1.xpose.msra.mxu0 0.0
        %1086 = vmatprep.subr.mxu0 0.0
        %1087 = vmatpush1.xpose.msra.mxu0 0.0
        %1088 = vmatprep.mubr.f32.mxu0 0.0
        %1089 = vmatmul.mubr.f32.gmra.mrb[0].mxu0 %v1020
        %v1090 = vpop.f32.mrb[0].mxu0
        %v1091 = vadd.f32 0.0, %v1090
        %v1092 = vpop.f32.mrb[0].mxu0
        %1093 = vdwg.mxu0
        %v1094 = vmul.f32 %v1091, 0.35355338
        %v1095 = vsel %vm521, %v1094, -inf
        %1096 = vmax.xlane.f32.xlu0 %v1095
        %v1097 = vpop.xlane.xlu0 %1096
        %v1098 = vsub.f32 %v1094, %v1097
        %v1099 = vmul.f32 %v1098, 1.442695
        %v1100 = vpow.pop %v1099
        %v1101 = vsel %vm521, %v1100, 0.0
        %1102 = vadd.xlane.f32.xlu0 %v1101
        %v1103 = vpop.xlane.xlu0 %1102
        %v1104 = vrcp.pop %v1103
        %v1105 = vmul.f32 %v1100, %v1104
        %1106 = vrot.lane.b32.xlu0 %v515, 40
        %v1107 = vpop.permute.xlu0 %1106
        %v1110 = vsel %vm521, %v1105, 0
        %1112 = vmatprep.subr.mxu0 0.0
        %1113 = vmatpush1.msra.mxu0 %v1107
        %1114 = vmatprep.subr.mxu0 0.0
        %1115 = vmatpush1.msra.mxu0 0.0
        %1116 = vmatprep.subr.mxu0 0.0
        %1117 = vmatpush1.msra.mxu0 0.0
        %1118 = vmatprep.subr.mxu0 0.0
        %1119 = vmatpush1.msra.mxu0 0.0
        %1120 = vmatprep.subr.mxu0 0.0
        %1121 = vmatpush1.msra.mxu0 0.0
        %1122 = vmatprep.subr.mxu0 0.0
        %1123 = vmatpush1.msra.mxu0 0.0
        %1124 = vmatprep.subr.mxu0 0.0
        %1125 = vmatpush1.msra.mxu0 0.0
        %1126 = vmatprep.subr.mxu0 0.0
        %1127 = vmatpush1.msra.mxu0 0.0
        %1128 = vmatprep.subr.mxu0 0.0
        %1129 = vmatpush1.msra.mxu0 0.0
        %1130 = vmatprep.subr.mxu0 0.0
        %1131 = vmatpush1.msra.mxu0 0.0
        %1132 = vmatprep.subr.mxu0 0.0
        %1133 = vmatpush1.msra.mxu0 0.0
        %1134 = vmatprep.subr.mxu0 0.0
        %1135 = vmatpush1.msra.mxu0 0.0
        %1136 = vmatprep.subr.mxu0 0.0
        %1137 = vmatpush1.msra.mxu0 0.0
        %1138 = vmatprep.subr.mxu0 0.0
        %1139 = vmatpush1.msra.mxu0 0.0
        %1140 = vmatprep.subr.mxu0 0.0
        %1141 = vmatpush1.msra.mxu0 0.0
        %1142 = vmatprep.subr.mxu0 0.0
        %1143 = vmatpush1.msra.mxu0 0.0
        %1144 = vmatprep.subr.mxu0 0.0
        %1145 = vmatpush1.msra.mxu0 0.0
        %1146 = vmatprep.subr.mxu0 0.0
        %1147 = vmatpush1.msra.mxu0 0.0
        %1148 = vmatprep.subr.mxu0 0.0
        %1149 = vmatpush1.msra.mxu0 0.0
        %1150 = vmatprep.subr.mxu0 0.0
        %1151 = vmatpush1.msra.mxu0 0.0
        %1152 = vmatprep.subr.mxu0 0.0
        %1153 = vmatpush1.msra.mxu0 0.0
        %1154 = vmatprep.subr.mxu0 0.0
        %1155 = vmatpush1.msra.mxu0 0.0
        %1156 = vmatprep.subr.mxu0 0.0
        %1157 = vmatpush1.msra.mxu0 0.0
        %1158 = vmatprep.subr.mxu0 0.0
        %1159 = vmatpush1.msra.mxu0 0.0
        %1160 = vmatprep.subr.mxu0 0.0
        %1161 = vmatpush1.msra.mxu0 0.0
        %1162 = vmatprep.subr.mxu0 0.0
        %1163 = vmatpush1.msra.mxu0 0.0
        %1164 = vmatprep.subr.mxu0 0.0
        %1165 = vmatpush1.msra.mxu0 0.0
        %1166 = vmatprep.subr.mxu0 0.0
        %1167 = vmatpush1.msra.mxu0 0.0
        %1168 = vmatprep.subr.mxu0 0.0
        %1169 = vmatpush1.msra.mxu0 0.0
        %1170 = vmatprep.subr.mxu0 0.0
        %1171 = vmatpush1.msra.mxu0 0.0
        %1172 = vmatprep.subr.mxu0 0.0
        %1173 = vmatpush1.msra.mxu0 0.0
        %1174 = vmatprep.subr.mxu0 0.0
        %1175 = vmatpush1.msra.mxu0 0.0
        %1176 = vmatprep.mubr.f32.mxu0 0.0
        %1177 = vmatmul.mubr.f32.gmra.mrb[0].mxu0 %v1110
        %v1178 = vpop.f32.mrb[0].mxu0
        %v1179 = vadd.f32 0.0, %v1178
        %v1180 = vpop.f32.mrb[0].mxu0
        %1181 = vdwg.mxu0
        %1183 = vrot.lane.b32.xlu0 %v847, 8
        %v1184 = vpop.permute.xlu0 %1183
        %1187 = vrot.lane.b32.xlu0 %v1013, 16
        %v1188 = vpop.permute.xlu0 %1187
        %1191 = vrot.lane.b32.xlu0 %v1179, 24
        %v1192 = vpop.permute.xlu0 %1191
        %v1194 = vsel %vm521, %v681, %v1184
        %vm1195 = vcmask 130048
        %v1196 = vsel %vm1195, %v1194, %v1188
        %vm1197 = vcmask 195584
        %v1198 = vsel %vm1197, %v1196, %v1192
        %v1199 = vld [vmem:[%s4] sm:$0xff]
        %v1200 = vld [vmem:[%s4 + $0x8] sm:$0xff]
        %v1201 = vld [vmem:[%s4 + $0x10] sm:$0xff]
        %v1202 = vld [vmem:[%s4 + $0x18] sm:$0xff]
        %v1203 = vld [vmem:[%s5] sm:$0x1]
        %v1205 = vlaneseq
        %v1206 = vshrl.u32 %v1205, 7
        %v1207 = vsub.s32 0, %v1206
        %v1208 = vrot.slane %v1203, %v1207
        %v1211 = vsel %vm412, %v1198, 0
        %1213 = vmatprep.subr.mxu0 0.0
        %1214 = vmatpush1.msra.mxu0 %v1199
        %1215 = vmatprep.subr.mxu0 0.0
        %1216 = vmatpush1.msra.mxu0 %v1200
        %1217 = vmatprep.subr.mxu0 0.0
        %1218 = vmatpush1.msra.mxu0 %v1201
        %1219 = vmatprep.subr.mxu0 0.0
        %1220 = vmatpush1.msra.mxu0 %v1202
        %1221 = vmatprep.subr.mxu0 0.0
        %1222 = vmatpush1.msra.mxu0 0.0
        %1223 = vmatprep.subr.mxu0 0.0
        %1224 = vmatpush1.msra.mxu0 0.0
        %1225 = vmatprep.subr.mxu0 0.0
        %1226 = vmatpush1.msra.mxu0 0.0
        %1227 = vmatprep.subr.mxu0 0.0
        %1228 = vmatpush1.msra.mxu0 0.0
        %1229 = vmatprep.subr.mxu0 0.0
        %1230 = vmatpush1.msra.mxu0 0.0
        %1231 = vmatprep.subr.mxu0 0.0
        %1232 = vmatpush1.msra.mxu0 0.0
        %1233 = vmatprep.subr.mxu0 0.0
        %1234 = vmatpush1.msra.mxu0 0.0
        %1235 = vmatprep.subr.mxu0 0.0
        %1236 = vmatpush1.msra.mxu0 0.0
        %1237 = vmatprep.subr.mxu0 0.0
        %1238 = vmatpush1.msra.mxu0 0.0
        %1239 = vmatprep.subr.mxu0 0.0
        %1240 = vmatpush1.msra.mxu0 0.0
        %1241 = vmatprep.subr.mxu0 0.0
        %1242 = vmatpush1.msra.mxu0 0.0
        %1243 = vmatprep.subr.mxu0 0.0
        %1244 = vmatpush1.msra.mxu0 0.0
        %1245 = vmatprep.subr.mxu0 0.0
        %1246 = vmatpush1.msra.mxu0 0.0
        %1247 = vmatprep.subr.mxu0 0.0
        %1248 = vmatpush1.msra.mxu0 0.0
        %1249 = vmatprep.subr.mxu0 0.0
        %1250 = vmatpush1.msra.mxu0 0.0
        %1251 = vmatprep.subr.mxu0 0.0
        %1252 = vmatpush1.msra.mxu0 0.0
        %1253 = vmatprep.subr.mxu0 0.0
        %1254 = vmatpush1.msra.mxu0 0.0
        %1255 = vmatprep.subr.mxu0 0.0
        %1256 = vmatpush1.msra.mxu0 0.0
        %1257 = vmatprep.subr.mxu0 0.0
        %1258 = vmatpush1.msra.mxu0 0.0
        %1259 = vmatprep.subr.mxu0 0.0
        %1260 = vmatpush1.msra.mxu0 0.0
        %1261 = vmatprep.subr.mxu0 0.0
        %1262 = vmatpush1.msra.mxu0 0.0
        %1263 = vmatprep.subr.mxu0 0.0
        %1264 = vmatpush1.msra.mxu0 0.0
        %1265 = vmatprep.subr.mxu0 0.0
        %1266 = vmatpush1.msra.mxu0 0.0
        %1267 = vmatprep.subr.mxu0 0.0
        %1268 = vmatpush1.msra.mxu0 0.0
        %1269 = vmatprep.subr.mxu0 0.0
        %1270 = vmatpush1.msra.mxu0 0.0
        %1271 = vmatprep.subr.mxu0 0.0
        %1272 = vmatpush1.msra.mxu0 0.0
        %1273 = vmatprep.subr.mxu0 0.0
        %1274 = vmatpush1.msra.mxu0 0.0
        %1275 = vmatprep.subr.mxu0 0.0
        %1276 = vmatpush1.msra.mxu0 0.0
        %1277 = vmatprep.mubr.f32.mxu0 0.0
        %1278 = vmatmul.mubr.f32.gmra.mrb[0].mxu0 %v1211
        %v1279 = vpop.f32.mrb[0].mxu0
        %v1280 = vadd.f32 %v1208, %v1279
        %v1281 = vpop.f32.mrb[0].mxu0
        %1282 = vdwg.mxu0
        %v1283 = vadd.f32 %v409, %v1280
        %v1284 = vld [vmem:[%s6] sm:$0x1]
        %v1285 = vld [vmem:[%s7] sm:$0x1]
        %v1286 = vsel %vm412, %v1283, 0.0
        %1287 = vadd.xlane.f32.xlu0 %v1286
        %v1288 = vpop.xlane.xlu0 %1287
        %v1289 = vmul.f32 %v1288, %v416
        %v1290 = vsub.f32 %v1283, %v1289
        %v1291 = vmul.f32 %v1290, %v1290
        %v1292 = vsel %vm412, %v1291, 0.0
        %1293 = vadd.xlane.f32.xlu0 %v1292
        %v1294 = vpop.xlane.xlu0 %1293
        %v1295 = vmul.f32 %v1294, %v416
        %v1296 = vadd.f32 %v1295, 1e-06
        %v1297 = vrsqrt.pop %v1296
        %v1298 = vmul.f32 %v1290, %v1297
        %v1300 = vlaneseq
        %v1301 = vshrl.u32 %v1300, 7
        %v1302 = vsub.s32 0, %v1301
        %v1303 = vrot.slane %v1284, %v1302
        %v1305 = vmul.f32 %v1298, %v1303
        %v1307 = vlaneseq
        %v1308 = vshrl.u32 %v1307, 7
        %v1309 = vsub.s32 0, %v1308
        %v1310 = vrot.slane %v1285, %v1309
        %v1312 = vadd.f32 %v1305, %v1310
        %v1313 = vld [vmem:[%s8] sm:$0xff]
        %v1314 = vld [vmem:[%s8 + $0x8] sm:$0xff]
        %v1315 = vld [vmem:[%s8 + $0x10] sm:$0xff]
        %v1316 = vld [vmem:[%s8 + $0x18] sm:$0xff]
        %v1317 = vld [vmem:[%s9] sm:$0x1]
        %v1319 = vlaneseq
        %v1320 = vshrl.u32 %v1319, 7
        %v1321 = vsub.s32 0, %v1320
        %v1322 = vrot.slane %v1317, %v1321
        %v1325 = vsel %vm412, %v1312, 0
        %1327 = vmatprep.subr.mxu0 0.0
        %1328 = vmatpush1.msra.mxu0 %v1313
        %1329 = vmatprep.subr.mxu0 0.0
        %1330 = vmatpush1.msra.mxu0 %v1314
        %1331 = vmatprep.subr.mxu0 0.0
        %1332 = vmatpush1.msra.mxu0 %v1315
        %1333 = vmatprep.subr.mxu0 0.0
        %1334 = vmatpush1.msra.mxu0 %v1316
        %1335 = vmatprep.subr.mxu0 0.0
        %1336 = vmatpush1.msra.mxu0 0.0
        %1337 = vmatprep.subr.mxu0 0.0
        %1338 = vmatpush1.msra.mxu0 0.0
        %1339 = vmatprep.subr.mxu0 0.0
        %1340 = vmatpush1.msra.mxu0 0.0
        %1341 = vmatprep.subr.mxu0 0.0
        %1342 = vmatpush1.msra.mxu0 0.0
        %1343 = vmatprep.subr.mxu0 0.0
        %1344 = vmatpush1.msra.mxu0 0.0
        %1345 = vmatprep.subr.mxu0 0.0
        %1346 = vmatpush1.msra.mxu0 0.0
        %1347 = vmatprep.subr.mxu0 0.0
        %1348 = vmatpush1.msra.mxu0 0.0
        %1349 = vmatprep.subr.mxu0 0.0
        %1350 = vmatpush1.msra.mxu0 0.0
        %1351 = vmatprep.subr.mxu0 0.0
        %1352 = vmatpush1.msra.mxu0 0.0
        %1353 = vmatprep.subr.mxu0 0.0
        %1354 = vmatpush1.msra.mxu0 0.0
        %1355 = vmatprep.subr.mxu0 0.0
        %1356 = vmatpush1.msra.mxu0 0.0
        %1357 = vmatprep.subr.mxu0 0.0
        %1358 = vmatpush1.msra.mxu0 0.0
        %1359 = vmatprep.subr.mxu0 0.0
        %1360 = vmatpush1.msra.mxu0 0.0
        %1361 = vmatprep.subr.mxu0 0.0
        %1362 = vmatpush1.msra.mxu0 0.0
        %1363 = vmatprep.subr.mxu0 0.0
        %1364 = vmatpush1.msra.mxu0 0.0
        %1365 = vmatprep.subr.mxu0 0.0
        %1366 = vmatpush1.msra.mxu0 0.0
        %1367 = vmatprep.subr.mxu0 0.0
        %1368 = vmatpush1.msra.mxu0 0.0
        %1369 = vmatprep.subr.mxu0 0.0
        %1370 = vmatpush1.msra.mxu0 0.0
        %1371 = vmatprep.subr.mxu0 0.0
        %1372 = vmatpush1.msra.mxu0 0.0
        %1373 = vmatprep.subr.mxu0 0.0
        %1374 = vmatpush1.msra.mxu0 0.0
        %1375 = vmatprep.subr.mxu0 0.0
        %1376 = vmatpush1.msra.mxu0 0.0
        %1377 = vmatprep.subr.mxu0 0.0
        %1378 = vmatpush1.msra.mxu0 0.0
        %1379 = vmatprep.subr.mxu0 0.0
        %1380 = vmatpush1.msra.mxu0 0.0
        %1381 = vmatprep.subr.mxu0 0.0
        %1382 = vmatpush1.msra.mxu0 0.0
        %1383 = vmatprep.subr.mxu0 0.0
        %1384 = vmatpush1.msra.mxu0 0.0
        %1385 = vmatprep.subr.mxu0 0.0
        %1386 = vmatpush1.msra.mxu0 0.0
        %1387 = vmatprep.subr.mxu0 0.0
        %1388 = vmatpush1.msra.mxu0 0.0
        %1389 = vmatprep.subr.mxu0 0.0
        %1390 = vmatpush1.msra.mxu0 0.0
        %1391 = vmatprep.mubr.f32.mxu0 0.0
        %1392 = vmatmul.mubr.f32.gmra.mrb[0].mxu0 %v1325
        %v1393 = vpop.f32.mrb[0].mxu0
        %v1394 = vadd.f32 %v1322, %v1393
        %v1395 = vpop.f32.mrb[0].mxu0
        %1396 = vdwg.mxu0
        %v1397 = vmul.f32 %v1394, %v1394
        %v1398 = vmul.f32 %v1394, %v1397
        %v1399 = vmul.f32 %v1398, 0.044715
        %v1400 = vadd.f32 %v1394, %v1399
        %v1401 = vmul.f32 %v1400, 0.7978846
        %v1402 = vtanh.pop %v1401
        %v1403 = vadd.f32 %v1402, 1.0
        %v1404 = vmul.f32 %v1403, 0.5
        %v1405 = vmul.f32 %v1394, %v1404
        %v1406 = vld [vmem:[%s10] sm:$0xff]
        %v1407 = vld [vmem:[%s10 + $0x8] sm:$0xff]
        %v1408 = vld [vmem:[%s10 + $0x10] sm:$0xff]
        %v1409 = vld [vmem:[%s10 + $0x18] sm:$0xff]
        %v1410 = vld [vmem:[%s10 + $0x20] sm:$0xff]
        %v1411 = vld [vmem:[%s10 + $0x28] sm:$0xff]
        %v1412 = vld [vmem:[%s10 + $0x30] sm:$0xff]
        %v1413 = vld [vmem:[%s10 + $0x38] sm:$0xff]
        %v1414 = vld [vmem:[%s10 + $0x40] sm:$0xff]
        %v1415 = vld [vmem:[%s10 + $0x48] sm:$0xff]
        %v1416 = vld [vmem:[%s10 + $0x50] sm:$0xff]
        %v1417 = vld [vmem:[%s10 + $0x58] sm:$0xff]
        %v1418 = vld [vmem:[%s10 + $0x60] sm:$0xff]
        %v1419 = vld [vmem:[%s10 + $0x68] sm:$0xff]
        %v1420 = vld [vmem:[%s10 + $0x70] sm:$0xff]
        %v1421 = vld [vmem:[%s10 + $0x78] sm:$0xff]
        %v1422 = vld [vmem:[%s11] sm:$0x1]
        %v1424 = vlaneseq
        %v1425 = vshrl.u32 %v1424, 7
        %v1426 = vsub.s32 0, %v1425
        %v1427 = vrot.slane %v1422, %v1426
        %1429 = vmatprep.subr.mxu0 0.0
        %1430 = vmatpush1.msra.mxu0 %v1406
        %1431 = vmatprep.subr.mxu0 0.0
        %1432 = vmatpush1.msra.mxu0 %v1407
        %1433 = vmatprep.subr.mxu0 0.0
        %1434 = vmatpush1.msra.mxu0 %v1408
        %1435 = vmatprep.subr.mxu0 0.0
        %1436 = vmatpush1.msra.mxu0 %v1409
        %1437 = vmatprep.subr.mxu0 0.0
        %1438 = vmatpush1.msra.mxu0 %v1410
        %1439 = vmatprep.subr.mxu0 0.0
        %1440 = vmatpush1.msra.mxu0 %v1411
        %1441 = vmatprep.subr.mxu0 0.0
        %1442 = vmatpush1.msra.mxu0 %v1412
        %1443 = vmatprep.subr.mxu0 0.0
        %1444 = vmatpush1.msra.mxu0 %v1413
        %1445 = vmatprep.subr.mxu0 0.0
        %1446 = vmatpush1.msra.mxu0 %v1414
        %1447 = vmatprep.subr.mxu0 0.0
        %1448 = vmatpush1.msra.mxu0 %v1415
        %1449 = vmatprep.subr.mxu0 0.0
        %1450 = vmatpush1.msra.mxu0 %v1416
        %1451 = vmatprep.subr.mxu0 0.0
        %1452 = vmatpush1.msra.mxu0 %v1417
        %1453 = vmatprep.subr.mxu0 0.0
        %1454 = vmatpush1.msra.mxu0 %v1418
        %1455 = vmatprep.subr.mxu0 0.0
        %1456 = vmatpush1.msra.mxu0 %v1419
        %1457 = vmatprep.subr.mxu0 0.0
        %1458 = vmatpush1.msra.mxu0 %v1420
        %1459 = vmatprep.subr.mxu0 0.0
        %1460 = vmatpush1.msra.mxu0 %v1421
        %1461 = vmatprep.subr.mxu0 0.0
        %1462 = vmatpush1.msra.mxu0 0.0
        %1463 = vmatprep.subr.mxu0 0.0
        %1464 = vmatpush1.msra.mxu0 0.0
        %1465 = vmatprep.subr.mxu0 0.0
        %1466 = vmatpush1.msra.mxu0 0.0
        %1467 = vmatprep.subr.mxu0 0.0
        %1468 = vmatpush1.msra.mxu0 0.0
        %1469 = vmatprep.subr.mxu0 0.0
        %1470 = vmatpush1.msra.mxu0 0.0
        %1471 = vmatprep.subr.mxu0 0.0
        %1472 = vmatpush1.msra.mxu0 0.0
        %1473 = vmatprep.subr.mxu0 0.0
        %1474 = vmatpush1.msra.mxu0 0.0
        %1475 = vmatprep.subr.mxu0 0.0
        %1476 = vmatpush1.msra.mxu0 0.0
        %1477 = vmatprep.subr.mxu0 0.0
        %1478 = vmatpush1.msra.mxu0 0.0
        %1479 = vmatprep.subr.mxu0 0.0
        %1480 = vmatpush1.msra.mxu0 0.0
        %1481 = vmatprep.subr.mxu0 0.0
        %1482 = vmatpush1.msra.mxu0 0.0
        %1483 = vmatprep.subr.mxu0 0.0
        %1484 = vmatpush1.msra.mxu0 0.0
        %1485 = vmatprep.subr.mxu0 0.0
        %1486 = vmatpush1.msra.mxu0 0.0
        %1487 = vmatprep.subr.mxu0 0.0
        %1488 = vmatpush1.msra.mxu0 0.0
        %1489 = vmatprep.subr.mxu0 0.0
        %1490 = vmatpush1.msra.mxu0 0.0
        %1491 = vmatprep.subr.mxu0 0.0
        %1492 = vmatpush1.msra.mxu0 0.0
        %1493 = vmatprep.mubr.f32.mxu0 0.0
        %1494 = vmatmul.mubr.f32.gmra.mrb[0].mxu0 %v1405
        %v1495 = vpop.f32.mrb[0].mxu0
        %v1496 = vadd.f32 %v1427, %v1495
        %v1497 = vpop.f32.mrb[0].mxu0
        %1498 = vdwg.mxu0
        %v1499 = vadd.f32 %v1283, %v1496
        %1500 = vst.msk [vmem:[%s404] sm:$0xff] %vm412, %v1499
        %s1501 = sand.u32 %s291, 1
        %s1502 = scalar_lea.sflag [#allocation3], %s1501
        %s1503 = sand.u32 %s291, 1
        %s1504 = smul.addr %s1503, 8
        %s1505 = scalar_lea.vmem [#allocation2], %s1504
        // Predicated region
        $region69: #{tpu_custom_call.1} parent=67 // pred_check
          %p1506 = pneg %p301
        $region70: #{tpu_custom_call.1} parent=67 // pred_check_branch
          %1508 = sbr.rel (%p1506) target = $region72
        $region71: #{tpu_custom_call.1} parent=67 // pred_region
          %s1510 = ssub.s32 128, 128
          %1511 = vsyncadd %s1502, %s1510
          %s1512 = smul.addr %s26, 128
          %s1513 = scalar_lea.hbm %s12, %s1512
          %s1515 = sshll.u32 %s1505, 4
          %s1516 = int_to_ptr.vmem [resolvable:$true] %s1515
          %1518 = dma.vmem_to_hbm [thread:$0]  %s1516, 128, %s1513, %s1502
        $region72: #{tpu_custom_call.1} parent=67 // pred_fallthru
          _
      $region68: #{tpu_custom_call.1} parent=5 // pred_fallthru
        _
      %p1519 = scmp.le.s32.totalorder 2, %s21
      // Predicated region
      $region73: #{tpu_custom_call.1} parent=5 // pred_check
        %p1520 = pneg %p1519
      $region74: #{tpu_custom_call.1} parent=5 // pred_check_branch
        %1522 = sbr.rel (%p1520) target = $region76
      $region75: #{tpu_custom_call.1} parent=5 // pred_region
        %s1523 = ssub.s32 %s21, 2
        // Predicated region
        $region77: #{tpu_custom_call.1} parent=75 // pred_check
          %p1524 = pneg %p307
        $region78: #{tpu_custom_call.1} parent=75 // pred_check_branch
          %1526 = sbr.rel (%p1524) target = $region80
        $region79: #{tpu_custom_call.1} parent=75 // pred_region
          %s1527 = sand.u32 %s292, 1
          %s1528 = scalar_lea.sflag [#allocation3], %s1527
          %s1529 = sand.u32 %s292, 1
          %s1530 = smul.addr %s1529, 8
          %s1531 = scalar_lea.vmem [#allocation2], %s1530
          %1532 = dma.done %s1528, 128
        $region80: #{tpu_custom_call.1} parent=75 // pred_fallthru
          _
      $region76: #{tpu_custom_call.1} parent=5 // pred_fallthru
        _
    $region6: #{tpu_custom_call.1} parent=1 // loop_footer
      %s25 = sadd.s32 1, %s21
    $region7: #{tpu_custom_call.1} parent=1 // loop_footer_branch
      %20 = sbr.rel target = $region3
    $region8: #{tpu_custom_call.1} parent=1 // loop_exit
      _
    %1533 = vsyncpa [#allocation3], 1
    %s1534 = scalar_lea.sflag [#allocation3], 1
    %1535 = vsyncpa %s1534, 1

</llo_original>
